<compile_context>
chip_gen: v7x
topology: tpu7x:2x2x1
jax: 0.10.0
libtpu: 0.0.40
codegen_flags: <defaults>
</compile_context>

<pallas_src>
import functools
import math

import jax
import jax.numpy as jnp
from jax.experimental import pallas as pl
from jax.experimental.pallas import tpu as pltpu


def rcab_kernel(x_ref, bw1_ref, b1_ref, bw2_ref, b2_ref,
                wd1_ref, bd1_ref, wd2_ref, bd2_ref, out_ref, *, H, Bblk):
    """One (Bblk, H, W*C) block per grid step; matmuls run on the flat
    (Bblk*H, W*C) lane-dense view."""
    WC = x_ref.shape[-1]
    M = Bblk * H

    x3 = x_ref[...]                                  # (Bblk, H, WC) f32
    x = x3.reshape(M, WC)                            # (M, WC), lane dense

    # Per-image edge-row masks for the vertical "same"-padding taps (the roll
    # below wraps across image boundaries; these masks zero the wrapped row).
    row = jax.lax.broadcasted_iota(jnp.int32, (M, WC), 0) % H

    def conv3x3(a, bw_ref, brow):
        # bw_ref[dy] is the (WC, WC) bf16 block-banded weight for vertical tap
        # dy; the band encodes the horizontal taps + horizontal zero padding.
        ab = a.astype(jnp.bfloat16)
        c0 = jnp.dot(ab, bw_ref[0], preferred_element_type=jnp.float32)
        c1 = jnp.dot(ab, bw_ref[1], preferred_element_type=jnp.float32)
        c2 = jnp.dot(ab, bw_ref[2], preferred_element_type=jnp.float32)
        # Vertical taps: XLU rolls + VPU edge masks (replaces MXU shift matmuls).
        down = jnp.where(row == 0, 0.0,
                         pltpu.roll(c0, shift=1, axis=0))       # row i <- i-1
        up = jnp.where(row == H - 1, 0.0,
                       pltpu.roll(c2, shift=M - 1, axis=0))     # row i <- i+1 (-1 mod M)
        return c1 + down + up + brow

    h1 = jnp.maximum(conv3x3(x, bw1_ref, b1_ref[...]), 0.0)
    res = conv3x3(h1, bw2_ref, b2_ref[...])          # res_scale pre-folded into bw2/b2

    # Channel attention, per image.  GAP is folded into wd1 (W-tiled, scaled
    # by 1/(H*W)); wd2/bd2 are W-tiled so the sigmoid output is already the
    # per-channel scale row; the Cr bottleneck is padded to 128 lanes.
    res3 = res.reshape(Bblk, H, WC)
    s = jnp.sum(res3, axis=1)                                              # (Bblk, WC)
    y1 = jnp.maximum(
        jnp.dot(s.astype(jnp.bfloat16), wd1_ref[...],
                preferred_element_type=jnp.float32) + bd1_ref[...], 0.0)   # (Bblk, Crp)
    scale = jax.nn.sigmoid(
        jnp.dot(y1.astype(jnp.bfloat16), wd2_ref[...],
                preferred_element_type=jnp.float32) + bd2_ref[...])        # (Bblk, WC)

    # Lane-dense f32 epilogue + lane-dense (unmasked) store.
    out_ref[...] = (res3 * scale[:, None, :] + x3).astype(out_ref.dtype)


def _band_weights(w, W):
    """(3,3,C,C) HWIO conv kernel -> (3, W*C, W*C) block-banded matrices.

    band[dy][(j+dx-1)*C + ci, j*C + co] = w[dy, dx, ci, co]; taps that fall
    outside [0, W) are simply absent (== horizontal zero padding).
    """
    mats = []
    for dy in range(3):
        m = None
        for dx in range(3):
            t = jnp.kron(jnp.eye(W, k=1 - dx, dtype=w.dtype), w[dy, dx])
            m = t if m is None else m + t
        mats.append(m)
    return jnp.stack(mats)                          # (3, W*C, W*C)


def rcab_forward(x_nchw, params, num=0, res_scale=1.0):
    """RCAB forward. x_nchw: (B, C, H, W) float32. `num` unused (see TODO)."""
    del num
    w1, b1, w2, b2, wd1, bd1, wd2, bd2 = params
    B, C, H, W = x_nchw.shape
    Cr = wd1.shape[1]
    WC = W * C
    Crp = ((Cr + 127) // 128) * 128                 # CA bottleneck padded to full lanes

    # NCHW -> NHWC -> lane-dense (B, H, W*C).  The transposes exist only
    # because the public interface is NCHW.
    x = jnp.transpose(x_nchw, (0, 2, 3, 1)).reshape(B, H, WC)

    # Trace-time constant folding of the parameters into the lane-dense form.
    # Band weights in bf16 (MXU is bf16-native on v5e/v6e/v7x); biases in f32.
    bw1 = _band_weights(w1, W)
    bw2 = _band_weights(w2, W)
    b1row = jnp.tile(b1, (1, W))
    b2row = jnp.tile(b2, (1, W))
    if res_scale != 1.0:
        bw2 = bw2 * res_scale
        b2row = b2row * res_scale
    bw1 = bw1.astype(jnp.bfloat16)
    bw2 = bw2.astype(jnp.bfloat16)

    wd1big = jnp.tile(wd1, (W, 1)) * (1.0 / (H * W))                 # GAP folded in
    wd1big = jnp.pad(wd1big, ((0, 0), (0, Crp - Cr))).astype(jnp.bfloat16)
    bd1pad = jnp.pad(bd1, ((0, 0), (0, Crp - Cr)))
    wd2big = jnp.pad(jnp.tile(wd2, (1, W)),
                     ((0, Crp - Cr), (0, 0))).astype(jnp.bfloat16)
    bd2big = jnp.tile(bd2, (1, W))

    # Batch blocking: fold the batch into the matmul M dim; keep 2 parallel
    # grid steps when B >= 4 so both v7x TensorCores get work.
    if B >= 4 and B % 2 == 0:
        Bblk = B // 2
    else:
        Bblk = B
    grid = (B // Bblk,)

    # Explicit scoped-VMEM budget (v5e default is only 16 MiB): conservative
    # double-buffer estimate of every block plus compiler-scratch headroom.
    blk_bytes = (
        2 * (Bblk * H * WC * 4) * 2                  # x + out blocks
        + 2 * (3 * WC * WC * 2) * 2                  # bw1 + bw2 (bf16)
        + 2 * (WC * 4) * 2                           # b1row + b2row
        + 2 * (WC * Crp * 2) * 2                     # wd1big + wd2big (bf16)
        + ((Crp + WC) * 4) * 2                       # bd1pad + bd2big
    )
    vmem_limit = min(64 << 20, max(16 << 20, 2 * blk_bytes + (4 << 20)))

    cost = pl.CostEstimate(
        flops=4 * B * H * W * 9 * C * C + 4 * B * WC * Crp + 8 * B * H * WC,
        transcendentals=B * WC,
        bytes_accessed=(2 * B * H * WC * 4                   # x + out
                        + 2 * 3 * WC * WC * 2                # band weights
                        + 2 * WC * Crp * 2                   # CA weights
                        + (2 * WC + Crp + WC) * 4))          # biases

    kernel = functools.partial(rcab_kernel, H=H, Bblk=Bblk)

    # TODO(synk): for realistic RCAN sizes, tile along W into strips with a
    # 1-column halo (the (WC,WC) band weights are O((W*C)^2)) and single-buffer
    # the grid-invariant weight specs via pipeline_mode=pl.Buffered(1); at
    # these shapes the whole-image band form is far under the VMEM budget.
    out2d = pl.pallas_call(
        kernel,
        out_shape=jax.ShapeDtypeStruct((B, H, WC), x.dtype),
        grid_spec=pltpu.PrefetchScalarGridSpec(
            num_scalar_prefetch=0,
            grid=grid,
            in_specs=[
                pl.BlockSpec((Bblk, H, WC), lambda b: (b, 0, 0)),
                pl.BlockSpec((3, WC, WC), lambda b: (0, 0, 0)),
                pl.BlockSpec((1, WC), lambda b: (0, 0)),
                pl.BlockSpec((3, WC, WC), lambda b: (0, 0, 0)),
                pl.BlockSpec((1, WC), lambda b: (0, 0)),
                pl.BlockSpec((WC, Crp), lambda b: (0, 0)),
                pl.BlockSpec((1, Crp), lambda b: (0, 0)),
                pl.BlockSpec((Crp, WC), lambda b: (0, 0)),
                pl.BlockSpec((1, WC), lambda b: (0, 0)),
            ],
            out_specs=pl.BlockSpec((Bblk, H, WC), lambda b: (b, 0, 0)),
        ),
        compiler_params=pltpu.CompilerParams(
            dimension_semantics=("parallel",),
            vmem_limit_bytes=int(vmem_limit)),
        cost_estimate=cost,
    )(x, bw1, b1row, bw2, b2row, wd1big, bd1pad, wd2big, bd2big)

    return jnp.transpose(out2d.reshape(B, H, W, C), (0, 3, 1, 2))   # back to NCHW


def rcab_reference(x_nchw, params, res_scale=1.0):
    """Pure-JAX f32 reference (same math) used to validate the kernel."""
    w1, b1, w2, b2, wd1, bd1, wd2, bd2 = params
    x = jnp.transpose(x_nchw, (0, 2, 3, 1))

    def conv(inp, w, b):
        out = jax.lax.conv_general_dilated(
            inp, w, (1, 1), 'SAME',
            dimension_numbers=('NHWC', 'HWIO', 'NHWC'))
        return out + b.reshape(1, 1, 1, -1)

    h = jnp.maximum(conv(x, w1, b1), 0.0)
    res = conv(h, w2, b2) * res_scale
    y = jnp.mean(res, axis=(1, 2))                               # (B, C)
    y1 = jnp.maximum(y @ wd1 + bd1.reshape(1, -1), 0.0)
    y2 = jax.nn.sigmoid(y1 @ wd2 + bd2.reshape(1, -1))
    out = res * y2[:, None, None, :] + x
    return jnp.transpose(out, (0, 3, 1, 2))


def make_params(key, n_feat, reduction, kernel_size=3):
    """Deterministic synthetic parameters.

    Conv weights stored HWIO (kH, kW, C_in, C_out); equivalent to PyTorch's
    OIHW weights transposed. 1x1 CALayer convs stored as (C_in, C_out) mats.
    """
    C, Cr = n_feat, n_feat // reduction
    ks = jax.random.split(key, 8)
    s_conv = 0.05
    w1 = jax.random.normal(ks[0], (kernel_size, kernel_size, C, C), jnp.float32) * s_conv
    b1 = jax.random.normal(ks[1], (1, C), jnp.float32) * 0.01
    w2 = jax.random.normal(ks[2], (kernel_size, kernel_size, C, C), jnp.float32) * s_conv
    b2 = jax.random.normal(ks[3], (1, C), jnp.float32) * 0.01
    wd1 = jax.random.normal(ks[4], (C, Cr), jnp.float32) * 0.1
    bd1 = jax.random.normal(ks[5], (1, Cr), jnp.float32) * 0.01
    wd2 = jax.random.normal(ks[6], (Cr, C), jnp.float32) * 0.1
    bd2 = jax.random.normal(ks[7], (1, C), jnp.float32) * 0.01
    return (w1, b1, w2, b2, wd1, bd1, wd2, bd2)


if __name__ == "__main__":
    # B=4 lets the kernel demonstrate both batch folding (Bblk=2 -> M=32) and
    # a 2-step "parallel" grid (both v7x TensorCores busy).
    B, n_feat, H, W = 4, 16, 16, 16
    reduction = 4
    res_scale = 1.0

    key = jax.random.PRNGKey(0)
    kx, kp = jax.random.split(key)
    x = jax.random.normal(kx, (B, n_feat, H, W), jnp.float32)
    params = make_params(kp, n_feat, reduction)

    fwd = jax.jit(functools.partial(rcab_forward, num=0, res_scale=res_scale))
    out = jax.block_until_ready(fwd(x, params))

    ref = jax.block_until_ready(rcab_reference(x, params, res_scale=res_scale))
    assert out.shape == (B, n_feat, H, W)
    # Tolerance loosened vs the all-f32 version to accommodate bf16 weights /
    # bf16 matmul operands (f32 accumulation).
    assert jnp.allclose(out, ref, atol=2e-2, rtol=2e-2), "mismatch vs reference"

    print("KERNEL_OK")
</pallas_src>

<mosaic_0001>
module attributes {stable_mosaic.version = 11 : i64} {
  func.func @rcab_kernel(%arg0: i32, %arg1: memref<2x16x256xf32, #tpu.memory_space<vmem>>, %arg2: memref<3x256x256xbf16, #tpu.memory_space<vmem>>, %arg3: memref<1x256xf32, #tpu.memory_space<vmem>>, %arg4: memref<3x256x256xbf16, #tpu.memory_space<vmem>>, %arg5: memref<1x256xf32, #tpu.memory_space<vmem>>, %arg6: memref<256x128xbf16, #tpu.memory_space<vmem>>, %arg7: memref<1x128xf32, #tpu.memory_space<vmem>>, %arg8: memref<128x256xbf16, #tpu.memory_space<vmem>>, %arg9: memref<1x256xf32, #tpu.memory_space<vmem>>, %arg10: memref<2x16x256xf32, #tpu.memory_space<vmem>>) attributes {dimension_semantics = [#tpu.dimension_semantics<parallel>], iteration_bounds = array<i64: 2>, scalar_prefetch = 0 : i64, scratch_operands = 0 : i64, tpu.core_type = #tpu.core_type<tc>, window_params = [{transform_indices = @transform_0, window_bounds = array<i64: 2, 16, 256>}, {pipeline_mode = #tpu.pipeline_mode<synchronous>, transform_indices = @transform_1, window_bounds = array<i64: 3, 256, 256>}, {pipeline_mode = #tpu.pipeline_mode<synchronous>, transform_indices = @transform_2, window_bounds = array<i64: 1, 256>}, {pipeline_mode = #tpu.pipeline_mode<synchronous>, transform_indices = @transform_3, window_bounds = array<i64: 3, 256, 256>}, {pipeline_mode = #tpu.pipeline_mode<synchronous>, transform_indices = @transform_4, window_bounds = array<i64: 1, 256>}, {pipeline_mode = #tpu.pipeline_mode<synchronous>, transform_indices = @transform_5, window_bounds = array<i64: 256, 128>}, {pipeline_mode = #tpu.pipeline_mode<synchronous>, transform_indices = @transform_6, window_bounds = array<i64: 1, 128>}, {pipeline_mode = #tpu.pipeline_mode<synchronous>, transform_indices = @transform_7, window_bounds = array<i64: 128, 256>}, {pipeline_mode = #tpu.pipeline_mode<synchronous>, transform_indices = @transform_8, window_bounds = array<i64: 1, 256>}, {transform_indices = @transform_9, window_bounds = array<i64: 2, 16, 256>}]} {
    %c0 = arith.constant 0 : index
    %c0_0 = arith.constant 0 : index
    %c0_1 = arith.constant 0 : index
    %0 = vector.load %arg1[%c0, %c0_0, %c0_1] : memref<2x16x256xf32, #tpu.memory_space<vmem>>, vector<2x16x256xf32>
    %1 = vector.shape_cast %0 : vector<2x16x256xf32> to vector<32x256xf32>
    %2 = tpu.iota {dimensions = array<i32: 0>} : vector<32x256xi32>
    %c16_i32 = arith.constant 16 : i32
    %c0_i32 = arith.constant 0 : i32
    %3 = arith.cmpi eq, %c16_i32, %c0_i32 : i32
    %c1_i32 = arith.constant 1 : i32
    %4 = arith.select %3, %c1_i32, %c16_i32 : i32
    %5 = vector.broadcast %4 : i32 to vector<32x256xi32>
    %6 = arith.remsi %2, %5 : vector<32x256xi32>
    %c0_i32_2 = arith.constant 0 : i32
    %7 = vector.broadcast %c0_i32_2 : i32 to vector<32x256xi32>
    %8 = arith.cmpi ne, %6, %7 : vector<32x256xi32>
    %c0_i32_3 = arith.constant 0 : i32
    %9 = vector.broadcast %c0_i32_3 : i32 to vector<32x256xi32>
    %10 = arith.cmpi slt, %6, %9 : vector<32x256xi32>
    %c0_i32_4 = arith.constant 0 : i32
    %11 = arith.cmpi slt, %4, %c0_i32_4 : i32
    %12 = vector.broadcast %11 : i1 to vector<32x256xi1>
    %13 = vector.broadcast %12 : vector<32x256xi1> to vector<32x256xi1>
    %14 = arith.xori %10, %13 : vector<32x256xi1>
    %15 = arith.andi %14, %8 : vector<32x256xi1>
    %16 = vector.broadcast %4 : i32 to vector<32x256xi32>
    %17 = arith.addi %6, %16 : vector<32x256xi32>
    %18 = arith.select %15, %17, %6 : vector<32x256xi1>, vector<32x256xi32>
    %c0_5 = arith.constant 0 : index
    %c0_6 = arith.constant 0 : index
    %19 = vector.load %arg3[%c0_5, %c0_6] : memref<1x256xf32, #tpu.memory_space<vmem>>, vector<1x256xf32>
    %20 = arith.truncf %1 : vector<32x256xf32> to vector<32x256xbf16>
    %c0_7 = arith.constant 0 : index
    %c0_8 = arith.constant 0 : index
    %c0_9 = arith.constant 0 : index
    %21 = vector.load %arg2[%c0_7, %c0_8, %c0_9] : memref<3x256x256xbf16, #tpu.memory_space<vmem>>, vector<1x256x256xbf16>
    %22 = vector.shape_cast %21 : vector<1x256x256xbf16> to vector<256x256xbf16>
    %cst = arith.constant dense<0.000000e+00> : vector<32x256xf32>
    %23 = tpu.matmul %20, %22, %cst {dimension_numbers = #tpu.dot_dimension_numbers<[1], [0], [0], [1], [0, 0, 1, 1], [], []>} : vector<32x256xbf16>, vector<256x256xbf16>, vector<32x256xf32> -> vector<32x256xf32>
    %c1 = arith.constant 1 : index
    %c0_10 = arith.constant 0 : index
    %c0_11 = arith.constant 0 : index
    %24 = vector.load %arg2[%c1, %c0_10, %c0_11] : memref<3x256x256xbf16, #tpu.memory_space<vmem>>, vector<1x256x256xbf16>
    %25 = vector.shape_cast %24 : vector<1x256x256xbf16> to vector<256x256xbf16>
    %cst_12 = arith.constant dense<0.000000e+00> : vector<32x256xf32>
    %26 = tpu.matmul %20, %25, %cst_12 {dimension_numbers = #tpu.dot_dimension_numbers<[1], [0], [0], [1], [0, 0, 1, 1], [], []>} : vector<32x256xbf16>, vector<256x256xbf16>, vector<32x256xf32> -> vector<32x256xf32>
    %c2 = arith.constant 2 : index
    %c0_13 = arith.constant 0 : index
    %c0_14 = arith.constant 0 : index
    %27 = vector.load %arg2[%c2, %c0_13, %c0_14] : memref<3x256x256xbf16, #tpu.memory_space<vmem>>, vector<1x256x256xbf16>
    %28 = vector.shape_cast %27 : vector<1x256x256xbf16> to vector<256x256xbf16>
    %cst_15 = arith.constant dense<0.000000e+00> : vector<32x256xf32>
    %29 = tpu.matmul %20, %28, %cst_15 {dimension_numbers = #tpu.dot_dimension_numbers<[1], [0], [0], [1], [0, 0, 1, 1], [], []>} : vector<32x256xbf16>, vector<256x256xbf16>, vector<32x256xf32> -> vector<32x256xf32>
    %c0_i32_16 = arith.constant 0 : i32
    %30 = vector.broadcast %c0_i32_16 : i32 to vector<32x256xi32>
    %31 = arith.cmpi eq, %18, %30 : vector<32x256xi32>
    %c1_i32_17 = arith.constant 1 : i32
    %32 = tpu.dynamic_rotate %23 by %c1_i32_17 dim 0 : vector<32x256xf32>, i32 -> vector<32x256xf32>
    %cst_18 = arith.constant 0.000000e+00 : f32
    %33 = vector.broadcast %cst_18 : f32 to vector<32x256xf32>
    %34 = arith.select %31, %33, %32 : vector<32x256xi1>, vector<32x256xf32>
    %c15_i32 = arith.constant 15 : i32
    %35 = vector.broadcast %c15_i32 : i32 to vector<32x256xi32>
    %36 = arith.cmpi eq, %18, %35 : vector<32x256xi32>
    %c31_i32 = arith.constant 31 : i32
    %37 = tpu.dynamic_rotate %29 by %c31_i32 dim 0 : vector<32x256xf32>, i32 -> vector<32x256xf32>
    %cst_19 = arith.constant 0.000000e+00 : f32
    %38 = vector.broadcast %cst_19 : f32 to vector<32x256xf32>
    %39 = arith.select %36, %38, %37 : vector<32x256xi1>, vector<32x256xf32>
    %40 = arith.addf %26, %34 : vector<32x256xf32>
    %41 = arith.addf %40, %39 : vector<32x256xf32>
    %42 = vector.broadcast %19 : vector<1x256xf32> to vector<32x256xf32>
    %43 = arith.addf %41, %42 : vector<32x256xf32>
    %cst_20 = arith.constant 0.000000e+00 : f32
    %44 = vector.broadcast %cst_20 : f32 to vector<32x256xf32>
    %45 = arith.maximumf %43, %44 : vector<32x256xf32>
    %c0_21 = arith.constant 0 : index
    %c0_22 = arith.constant 0 : index
    %46 = vector.load %arg5[%c0_21, %c0_22] : memref<1x256xf32, #tpu.memory_space<vmem>>, vector<1x256xf32>
    %47 = arith.truncf %45 : vector<32x256xf32> to vector<32x256xbf16>
    %c0_23 = arith.constant 0 : index
    %c0_24 = arith.constant 0 : index
    %c0_25 = arith.constant 0 : index
    %48 = vector.load %arg4[%c0_23, %c0_24, %c0_25] : memref<3x256x256xbf16, #tpu.memory_space<vmem>>, vector<1x256x256xbf16>
    %49 = vector.shape_cast %48 : vector<1x256x256xbf16> to vector<256x256xbf16>
    %cst_26 = arith.constant dense<0.000000e+00> : vector<32x256xf32>
    %50 = tpu.matmul %47, %49, %cst_26 {dimension_numbers = #tpu.dot_dimension_numbers<[1], [0], [0], [1], [0, 0, 1, 1], [], []>} : vector<32x256xbf16>, vector<256x256xbf16>, vector<32x256xf32> -> vector<32x256xf32>
    %c1_27 = arith.constant 1 : index
    %c0_28 = arith.constant 0 : index
    %c0_29 = arith.constant 0 : index
    %51 = vector.load %arg4[%c1_27, %c0_28, %c0_29] : memref<3x256x256xbf16, #tpu.memory_space<vmem>>, vector<1x256x256xbf16>
    %52 = vector.shape_cast %51 : vector<1x256x256xbf16> to vector<256x256xbf16>
    %cst_30 = arith.constant dense<0.000000e+00> : vector<32x256xf32>
    %53 = tpu.matmul %47, %52, %cst_30 {dimension_numbers = #tpu.dot_dimension_numbers<[1], [0], [0], [1], [0, 0, 1, 1], [], []>} : vector<32x256xbf16>, vector<256x256xbf16>, vector<32x256xf32> -> vector<32x256xf32>
    %c2_31 = arith.constant 2 : index
    %c0_32 = arith.constant 0 : index
    %c0_33 = arith.constant 0 : index
    %54 = vector.load %arg4[%c2_31, %c0_32, %c0_33] : memref<3x256x256xbf16, #tpu.memory_space<vmem>>, vector<1x256x256xbf16>
    %55 = vector.shape_cast %54 : vector<1x256x256xbf16> to vector<256x256xbf16>
    %cst_34 = arith.constant dense<0.000000e+00> : vector<32x256xf32>
    %56 = tpu.matmul %47, %55, %cst_34 {dimension_numbers = #tpu.dot_dimension_numbers<[1], [0], [0], [1], [0, 0, 1, 1], [], []>} : vector<32x256xbf16>, vector<256x256xbf16>, vector<32x256xf32> -> vector<32x256xf32>
    %c0_i32_35 = arith.constant 0 : i32
    %57 = vector.broadcast %c0_i32_35 : i32 to vector<32x256xi32>
    %58 = arith.cmpi eq, %18, %57 : vector<32x256xi32>
    %c1_i32_36 = arith.constant 1 : i32
    %59 = tpu.dynamic_rotate %50 by %c1_i32_36 dim 0 : vector<32x256xf32>, i32 -> vector<32x256xf32>
    %cst_37 = arith.constant 0.000000e+00 : f32
    %60 = vector.broadcast %cst_37 : f32 to vector<32x256xf32>
    %61 = arith.select %58, %60, %59 : vector<32x256xi1>, vector<32x256xf32>
    %c15_i32_38 = arith.constant 15 : i32
    %62 = vector.broadcast %c15_i32_38 : i32 to vector<32x256xi32>
    %63 = arith.cmpi eq, %18, %62 : vector<32x256xi32>
    %c31_i32_39 = arith.constant 31 : i32
    %64 = tpu.dynamic_rotate %56 by %c31_i32_39 dim 0 : vector<32x256xf32>, i32 -> vector<32x256xf32>
    %cst_40 = arith.constant 0.000000e+00 : f32
    %65 = vector.broadcast %cst_40 : f32 to vector<32x256xf32>
    %66 = arith.select %63, %65, %64 : vector<32x256xi1>, vector<32x256xf32>
    %67 = arith.addf %53, %61 : vector<32x256xf32>
    %68 = arith.addf %67, %66 : vector<32x256xf32>
    %69 = vector.broadcast %46 : vector<1x256xf32> to vector<32x256xf32>
    %70 = arith.addf %68, %69 : vector<32x256xf32>
    %71 = vector.shape_cast %70 : vector<32x256xf32> to vector<2x16x256xf32>
    %cst_41 = arith.constant dense<0.000000e+00> : vector<2x256xf32>
    %72 = vector.multi_reduction <add>, %71, %cst_41 [1] : vector<2x16x256xf32> to vector<2x256xf32>
    %73 = arith.truncf %72 : vector<2x256xf32> to vector<2x256xbf16>
    %c0_42 = arith.constant 0 : index
    %c0_43 = arith.constant 0 : index
    %74 = vector.load %arg6[%c0_42, %c0_43] : memref<256x128xbf16, #tpu.memory_space<vmem>>, vector<256x128xbf16>
    %cst_44 = arith.constant dense<0.000000e+00> : vector<2x128xf32>
    %75 = tpu.matmul %73, %74, %cst_44 {dimension_numbers = #tpu.dot_dimension_numbers<[1], [0], [0], [1], [0, 0, 1, 1], [], []>} : vector<2x256xbf16>, vector<256x128xbf16>, vector<2x128xf32> -> vector<2x128xf32>
    %c0_45 = arith.constant 0 : index
    %c0_46 = arith.constant 0 : index
    %76 = vector.load %arg7[%c0_45, %c0_46] : memref<1x128xf32, #tpu.memory_space<vmem>>, vector<1x128xf32>
    %77 = vector.broadcast %76 : vector<1x128xf32> to vector<2x128xf32>
    %78 = arith.addf %75, %77 : vector<2x128xf32>
    %cst_47 = arith.constant 0.000000e+00 : f32
    %79 = vector.broadcast %cst_47 : f32 to vector<2x128xf32>
    %80 = arith.maximumf %78, %79 : vector<2x128xf32>
    %81 = arith.truncf %80 : vector<2x128xf32> to vector<2x128xbf16>
    %c0_48 = arith.constant 0 : index
    %c0_49 = arith.constant 0 : index
    %82 = vector.load %arg8[%c0_48, %c0_49] : memref<128x256xbf16, #tpu.memory_space<vmem>>, vector<128x256xbf16>
    %cst_50 = arith.constant dense<0.000000e+00> : vector<2x256xf32>
    %83 = tpu.matmul %81, %82, %cst_50 {dimension_numbers = #tpu.dot_dimension_numbers<[1], [0], [0], [1], [0, 0, 1, 1], [], []>} : vector<2x128xbf16>, vector<128x256xbf16>, vector<2x256xf32> -> vector<2x256xf32>
    %c0_51 = arith.constant 0 : index
    %c0_52 = arith.constant 0 : index
    %84 = vector.load %arg9[%c0_51, %c0_52] : memref<1x256xf32, #tpu.memory_space<vmem>>, vector<1x256xf32>
    %85 = vector.broadcast %84 : vector<1x256xf32> to vector<2x256xf32>
    %86 = arith.addf %83, %85 : vector<2x256xf32>
    %87 = arith.negf %86 : vector<2x256xf32>
    %88 = math.exp %87 : vector<2x256xf32>
    %cst_53 = arith.constant 1.000000e+00 : f32
    %89 = vector.broadcast %cst_53 : f32 to vector<2x256xf32>
    %90 = arith.addf %89, %88 : vector<2x256xf32>
    %91 = arith.divf %89, %90 : vector<2x256xf32>
    %92 = vector.shape_cast %91 : vector<2x256xf32> to vector<2x1x256xf32>
    %93 = vector.broadcast %92 : vector<2x1x256xf32> to vector<2x16x256xf32>
    %94 = arith.mulf %71, %93 : vector<2x16x256xf32>
    %95 = arith.addf %94, %0 : vector<2x16x256xf32>
    %c0_54 = arith.constant 0 : index
    %c0_55 = arith.constant 0 : index
    %c0_56 = arith.constant 0 : index
    %96 = vector.load %arg10[%c0_54, %c0_55, %c0_56] : memref<2x16x256xf32, #tpu.memory_space<vmem>>, vector<2x16x256xf32>
    tpu.vector_store %arg10[%c0_54, %c0_55, %c0_56], %95 {strides = array<i32>} : memref<2x16x256xf32, #tpu.memory_space<vmem>>, vector<2x16x256xf32>,
    return
  }
  func.func @transform_0(%arg0: i32) -> (i32, i32, i32) {
    %c0_i32 = arith.constant 0 : i32
    %c0_i32_0 = arith.constant 0 : i32
    %c0_i32_1 = arith.constant 0 : i32
    return %arg0, %c0_i32, %c0_i32_0 : i32, i32, i32
  }
  func.func @transform_1(%arg0: i32) -> (i32, i32, i32) {
    %c0_i32 = arith.constant 0 : i32
    %c0_i32_0 = arith.constant 0 : i32
    %c0_i32_1 = arith.constant 0 : i32
    %c0_i32_2 = arith.constant 0 : i32
    return %c0_i32, %c0_i32_0, %c0_i32_1 : i32, i32, i32
  }
  func.func @transform_2(%arg0: i32) -> (i32, i32) {
    %c0_i32 = arith.constant 0 : i32
    %c0_i32_0 = arith.constant 0 : i32
    %c0_i32_1 = arith.constant 0 : i32
    return %c0_i32, %c0_i32_0 : i32, i32
  }
  func.func @transform_3(%arg0: i32) -> (i32, i32, i32) {
    %c0_i32 = arith.constant 0 : i32
    %c0_i32_0 = arith.constant 0 : i32
    %c0_i32_1 = arith.constant 0 : i32
    %c0_i32_2 = arith.constant 0 : i32
    return %c0_i32, %c0_i32_0, %c0_i32_1 : i32, i32, i32
  }
  func.func @transform_4(%arg0: i32) -> (i32, i32) {
    %c0_i32 = arith.constant 0 : i32
    %c0_i32_0 = arith.constant 0 : i32
    %c0_i32_1 = arith.constant 0 : i32
    return %c0_i32, %c0_i32_0 : i32, i32
  }
  func.func @transform_5(%arg0: i32) -> (i32, i32) {
    %c0_i32 = arith.constant 0 : i32
    %c0_i32_0 = arith.constant 0 : i32
    %c0_i32_1 = arith.constant 0 : i32
    return %c0_i32, %c0_i32_0 : i32, i32
  }
  func.func @transform_6(%arg0: i32) -> (i32, i32) {
    %c0_i32 = arith.constant 0 : i32
    %c0_i32_0 = arith.constant 0 : i32
    %c0_i32_1 = arith.constant 0 : i32
    return %c0_i32, %c0_i32_0 : i32, i32
  }
  func.func @transform_7(%arg0: i32) -> (i32, i32) {
    %c0_i32 = arith.constant 0 : i32
    %c0_i32_0 = arith.constant 0 : i32
    %c0_i32_1 = arith.constant 0 : i32
    return %c0_i32, %c0_i32_0 : i32, i32
  }
  func.func @transform_8(%arg0: i32) -> (i32, i32) {
    %c0_i32 = arith.constant 0 : i32
    %c0_i32_0 = arith.constant 0 : i32
    %c0_i32_1 = arith.constant 0 : i32
    return %c0_i32, %c0_i32_0 : i32, i32
  }
  func.func @transform_9(%arg0: i32) -> (i32, i32, i32) {
    %c0_i32 = arith.constant 0 : i32
    %c0_i32_0 = arith.constant 0 : i32
    %c0_i32_1 = arith.constant 0 : i32
    return %arg0, %c0_i32, %c0_i32_0 : i32, i32, i32
  }
}

</mosaic_0001>

<llo_original>
// kernel: tile.0
$region0: #{tile.0}
  %s0 = inlined_call_operand.vmem [shape: bf16[4,16,16], index: 0, kind: input, shape index: {}]
  %s1 = inlined_call_operand.vmem [shape: bf16[4,256], index: 1, kind: output, shape index: {}]
  $region1: #{tile.0} parent=0
    #allocation0 [shape = 'u8[8192]{0}', space=vmem, size = 0x2000, scoped, tag = 'scoped mem for output reshape']
    #allocation1 [shape = 'u8[32768]{0}', space=vmem, size = 0x8000, scoped, tag = 'scoped mem for input reshape']
    %s3 = smul.u32 4, 2
    %s4 = sshllo.u32 0, %s3
    %s5 = smul.addr 4, 7
    %s6 = scalar_lea.vmem %s0, %s5
    %s7 = sshrl.u32 %s4, 1
    %s8 = sor.u32 %s4, %s7
    %s9 = sand.u32 %s8, 85
    %s10 = sshrl.u32 %s9, 1
    %s11 = sor.u32 %s9, %s10
    %s12 = sand.u32 51, %s11
    %s13 = sshrl.u32 %s12, 2
    %s14 = sor.u32 %s12, %s13
    %s15 = sand.u32 15, %s14
    %v16 = vld [vmem:[%s6] sm:%s15]
    %v17 = vunpack.c.l.bf16 %v16
    %v18 = vunpack.c.h.bf16 %v16
    %s19 = scalar_lea.vmem [#allocation1], 56
    %20 = vst [vmem:[%s19] sm:%s4] %v17
    %s21 = smul.addr 4, 6
    %s22 = scalar_lea.vmem %s0, %s21
    %s23 = sshrl.u32 %s4, 1
    %s24 = sor.u32 %s4, %s23
    %s25 = sand.u32 %s24, 85
    %s26 = sshrl.u32 %s25, 1
    %s27 = sor.u32 %s25, %s26
    %s28 = sand.u32 51, %s27
    %s29 = sshrl.u32 %s28, 2
    %s30 = sor.u32 %s28, %s29
    %s31 = sand.u32 15, %s30
    %v32 = vld [vmem:[%s22] sm:%s31]
    %v33 = vunpack.c.l.bf16 %v32
    %v34 = vunpack.c.h.bf16 %v32
    %s35 = scalar_lea.vmem [#allocation1], 48
    %36 = vst [vmem:[%s35] sm:%s4] %v33
    %s37 = smul.addr 4, 5
    %s38 = scalar_lea.vmem %s0, %s37
    %s39 = sshrl.u32 %s4, 1
    %s40 = sor.u32 %s4, %s39
    %s41 = sand.u32 %s40, 85
    %s42 = sshrl.u32 %s41, 1
    %s43 = sor.u32 %s41, %s42
    %s44 = sand.u32 51, %s43
    %s45 = sshrl.u32 %s44, 2
    %s46 = sor.u32 %s44, %s45
    %s47 = sand.u32 15, %s46
    %v48 = vld [vmem:[%s38] sm:%s47]
    %v49 = vunpack.c.l.bf16 %v48
    %v50 = vunpack.c.h.bf16 %v48
    %s51 = scalar_lea.vmem [#allocation1], 40
    %52 = vst [vmem:[%s51] sm:%s4] %v49
    %s53 = smul.addr 4, 4
    %s54 = scalar_lea.vmem %s0, %s53
    %s55 = sshrl.u32 %s4, 1
    %s56 = sor.u32 %s4, %s55
    %s57 = sand.u32 %s56, 85
    %s58 = sshrl.u32 %s57, 1
    %s59 = sor.u32 %s57, %s58
    %s60 = sand.u32 51, %s59
    %s61 = sshrl.u32 %s60, 2
    %s62 = sor.u32 %s60, %s61
    %s63 = sand.u32 15, %s62
    %v64 = vld [vmem:[%s54] sm:%s63]
    %v65 = vunpack.c.l.bf16 %v64
    %v66 = vunpack.c.h.bf16 %v64
    %s67 = scalar_lea.vmem [#allocation1], 32
    %68 = vst [vmem:[%s67] sm:%s4] %v65
    %s69 = smul.addr 4, 3
    %s70 = scalar_lea.vmem %s0, %s69
    %s71 = sshrl.u32 %s4, 1
    %s72 = sor.u32 %s4, %s71
    %s73 = sand.u32 %s72, 85
    %s74 = sshrl.u32 %s73, 1
    %s75 = sor.u32 %s73, %s74
    %s76 = sand.u32 51, %s75
    %s77 = sshrl.u32 %s76, 2
    %s78 = sor.u32 %s76, %s77
    %s79 = sand.u32 15, %s78
    %v80 = vld [vmem:[%s70] sm:%s79]
    %v81 = vunpack.c.l.bf16 %v80
    %v82 = vunpack.c.h.bf16 %v80
    %s83 = scalar_lea.vmem [#allocation1], 24
    %84 = vst [vmem:[%s83] sm:%s4] %v81
    %s85 = smul.addr 4, 2
    %s86 = scalar_lea.vmem %s0, %s85
    %s87 = sshrl.u32 %s4, 1
    %s88 = sor.u32 %s4, %s87
    %s89 = sand.u32 %s88, 85
    %s90 = sshrl.u32 %s89, 1
    %s91 = sor.u32 %s89, %s90
    %s92 = sand.u32 51, %s91
    %s93 = sshrl.u32 %s92, 2
    %s94 = sor.u32 %s92, %s93
    %s95 = sand.u32 15, %s94
    %v96 = vld [vmem:[%s86] sm:%s95]
    %v97 = vunpack.c.l.bf16 %v96
    %v98 = vunpack.c.h.bf16 %v96
    %s99 = scalar_lea.vmem [#allocation1], 16
    %100 = vst [vmem:[%s99] sm:%s4] %v97
    %s101 = scalar_lea.vmem %s0, 4
    %s102 = sshrl.u32 %s4, 1
    %s103 = sor.u32 %s4, %s102
    %s104 = sand.u32 %s103, 85
    %s105 = sshrl.u32 %s104, 1
    %s106 = sor.u32 %s104, %s105
    %s107 = sand.u32 51, %s106
    %s108 = sshrl.u32 %s107, 2
    %s109 = sor.u32 %s107, %s108
    %s110 = sand.u32 15, %s109
    %v111 = vld [vmem:[%s101] sm:%s110]
    %v112 = vunpack.c.l.bf16 %v111
    %v113 = vunpack.c.h.bf16 %v111
    %s114 = scalar_lea.vmem [#allocation1], 8
    %115 = vst [vmem:[%s114] sm:%s4] %v112
    %s116 = sshrl.u32 %s4, 1
    %s117 = sor.u32 %s4, %s116
    %s118 = sand.u32 %s117, 85
    %s119 = sshrl.u32 %s118, 1
    %s120 = sor.u32 %s118, %s119
    %s121 = sand.u32 51, %s120
    %s122 = sshrl.u32 %s121, 2
    %s123 = sor.u32 %s121, %s122
    %s124 = sand.u32 15, %s123
    %v125 = vld [vmem:[%s0] sm:%s124]
    %v126 = vunpack.c.l.bf16 %v125
    %v127 = vunpack.c.h.bf16 %v125
    %128 = vst [vmem:[#allocation1] sm:%s4] %v126
    %v129 = vld [vmem:[#allocation1] ss:$8 sm:$0xf]
    %v130 = vld [vmem:[#allocation1] ss:$8 sm:$0xf0]
    %vm131 = vcmask 1047556
    %v132 = vsel %vm131, %v130, %v129
    %vm133 = vcmask 130048
    %134 = vst.msk [vmem:[#allocation0] ss:$8 sm:$0x3] %vm133, %v132
    %s135 = scalar_lea.vmem [#allocation0], 4294967281
    %136 = vst.msk [vmem:[%s135] ss:$8 sm:$0xc] %vm133, %v132
    %s137 = scalar_lea.vmem [#allocation0], 4294967266
    %138 = vst.msk [vmem:[%s137] ss:$8 sm:$0x30] %vm133, %v132
    %s139 = scalar_lea.vmem [#allocation0], 4294967251
    %140 = vst.msk [vmem:[%s139] ss:$8 sm:$0xc0] %vm133, %v132
    %s141 = scalar_lea.vmem [#allocation1], 7
    %s142 = smov 3
    %v143 = vld [vmem:[%s141] ss:$16 sm:%s142]
    %s144 = scalar_lea.vmem [#allocation1], 7
    %s145 = smov 12
    %v146 = vld [vmem:[%s144] ss:$16 sm:%s145]
    %vm147 = vcmask 1043458
    %v148 = vsel %vm147, %v146, %v143
    %s149 = scalar_lea.vmem [#allocation1], 4294967247
    %s150 = smov 48
    %v151 = vld [vmem:[%s149] ss:$16 sm:%s150]
    %vm152 = vcmask 1045508
    %v153 = vsel %vm152, %v151, %v148
    %s154 = scalar_lea.vmem [#allocation1], 4294967247
    %s155 = smov 192
    %v156 = vld [vmem:[%s154] ss:$16 sm:%s155]
    %vm157 = vcmask 1047558
    %v158 = vsel %vm157, %v156, %v153
    %159 = vrot.lane.b32.xlu0 %v158, 112
    %v160 = vpop.permute.xlu0 %159
    %vm161 = vcmask 1048448
    %162 = vst.msk [vmem:[#allocation0] sm:$0xf] %vm161, %v160
    %s163 = scalar_lea.vmem [#allocation0], 4
    %164 = vst.msk [vmem:[%s163] sm:$0xf0] %vm161, %v160
    %s165 = scalar_lea.vmem [#allocation1], 6
    %s166 = smov 3
    %v167 = vld [vmem:[%s165] ss:$16 sm:%s166]
    %s168 = scalar_lea.vmem [#allocation1], 6
    %s169 = smov 12
    %v170 = vld [vmem:[%s168] ss:$16 sm:%s169]
    %vm171 = vcmask 1043458
    %v172 = vsel %vm171, %v170, %v167
    %s173 = scalar_lea.vmem [#allocation1], 4294967246
    %s174 = smov 48
    %v175 = vld [vmem:[%s173] ss:$16 sm:%s174]
    %vm176 = vcmask 1045508
    %v177 = vsel %vm176, %v175, %v172
    %s178 = scalar_lea.vmem [#allocation1], 4294967246
    %s179 = smov 192
    %v180 = vld [vmem:[%s178] ss:$16 sm:%s179]
    %vm181 = vcmask 1047558
    %v182 = vsel %vm181, %v180, %v177
    %183 = vrot.lane.b32.xlu0 %v182, 96
    %v184 = vpop.permute.xlu0 %183
    %vm185 = vcmask 917248
    %186 = vst.msk [vmem:[#allocation0] sm:$0xf] %vm185, %v184
    %s187 = scalar_lea.vmem [#allocation0], 4
    %188 = vst.msk [vmem:[%s187] sm:$0xf0] %vm185, %v184
    %s189 = scalar_lea.vmem [#allocation1], 5
    %s190 = smov 3
    %v191 = vld [vmem:[%s189] ss:$16 sm:%s190]
    %s192 = scalar_lea.vmem [#allocation1], 5
    %s193 = smov 12
    %v194 = vld [vmem:[%s192] ss:$16 sm:%s193]
    %vm195 = vcmask 1043458
    %v196 = vsel %vm195, %v194, %v191
    %s197 = scalar_lea.vmem [#allocation1], 4294967245
    %s198 = smov 48
    %v199 = vld [vmem:[%s197] ss:$16 sm:%s198]
    %vm200 = vcmask 1045508
    %v201 = vsel %vm200, %v199, %v196
    %s202 = scalar_lea.vmem [#allocation1], 4294967245
    %s203 = smov 192
    %v204 = vld [vmem:[%s202] ss:$16 sm:%s203]
    %vm205 = vcmask 1047558
    %v206 = vsel %vm205, %v204, %v201
    %207 = vrot.lane.b32.xlu0 %v206, 80
    %v208 = vpop.permute.xlu0 %207
    %vm209 = vcmask 786048
    %210 = vst.msk [vmem:[#allocation0] sm:$0xf] %vm209, %v208
    %s211 = scalar_lea.vmem [#allocation0], 4
    %212 = vst.msk [vmem:[%s211] sm:$0xf0] %vm209, %v208
    %s213 = scalar_lea.vmem [#allocation1], 4
    %s214 = smov 3
    %v215 = vld [vmem:[%s213] ss:$16 sm:%s214]
    %s216 = scalar_lea.vmem [#allocation1], 4
    %s217 = smov 12
    %v218 = vld [vmem:[%s216] ss:$16 sm:%s217]
    %vm219 = vcmask 1043458
    %v220 = vsel %vm219, %v218, %v215
    %s221 = scalar_lea.vmem [#allocation1], 4294967244
    %s222 = smov 48
    %v223 = vld [vmem:[%s221] ss:$16 sm:%s222]
    %vm224 = vcmask 1045508
    %v225 = vsel %vm224, %v223, %v220
    %s226 = scalar_lea.vmem [#allocation1], 4294967244
    %s227 = smov 192
    %v228 = vld [vmem:[%s226] ss:$16 sm:%s227]
    %vm229 = vcmask 1047558
    %v230 = vsel %vm229, %v228, %v225
    %231 = vrot.lane.b32.xlu0 %v230, 64
    %v232 = vpop.permute.xlu0 %231
    %vm233 = vcmask 654848
    %234 = vst.msk [vmem:[#allocation0] sm:$0xf] %vm233, %v232
    %s235 = scalar_lea.vmem [#allocation0], 4
    %236 = vst.msk [vmem:[%s235] sm:$0xf0] %vm233, %v232
    %s237 = scalar_lea.vmem [#allocation1], 3
    %s238 = smov 3
    %v239 = vld [vmem:[%s237] ss:$16 sm:%s238]
    %s240 = scalar_lea.vmem [#allocation1], 3
    %s241 = smov 12
    %v242 = vld [vmem:[%s240] ss:$16 sm:%s241]
    %vm243 = vcmask 1043458
    %v244 = vsel %vm243, %v242, %v239
    %s245 = scalar_lea.vmem [#allocation1], 4294967243
    %s246 = smov 48
    %v247 = vld [vmem:[%s245] ss:$16 sm:%s246]
    %vm248 = vcmask 1045508
    %v249 = vsel %vm248, %v247, %v244
    %s250 = scalar_lea.vmem [#allocation1], 4294967243
    %s251 = smov 192
    %v252 = vld [vmem:[%s250] ss:$16 sm:%s251]
    %vm253 = vcmask 1047558
    %v254 = vsel %vm253, %v252, %v249
    %255 = vrot.lane.b32.xlu0 %v254, 48
    %v256 = vpop.permute.xlu0 %255
    %vm257 = vcmask 523648
    %258 = vst.msk [vmem:[#allocation0] sm:$0xf] %vm257, %v256
    %s259 = scalar_lea.vmem [#allocation0], 4
    %260 = vst.msk [vmem:[%s259] sm:$0xf0] %vm257, %v256
    %s261 = scalar_lea.vmem [#allocation1], 2
    %s262 = smov 3
    %v263 = vld [vmem:[%s261] ss:$16 sm:%s262]
    %s264 = scalar_lea.vmem [#allocation1], 2
    %s265 = smov 12
    %v266 = vld [vmem:[%s264] ss:$16 sm:%s265]
    %vm267 = vcmask 1043458
    %v268 = vsel %vm267, %v266, %v263
    %s269 = scalar_lea.vmem [#allocation1], 4294967242
    %s270 = smov 48
    %v271 = vld [vmem:[%s269] ss:$16 sm:%s270]
    %vm272 = vcmask 1045508
    %v273 = vsel %vm272, %v271, %v268
    %s274 = scalar_lea.vmem [#allocation1], 4294967242
    %s275 = smov 192
    %v276 = vld [vmem:[%s274] ss:$16 sm:%s275]
    %vm277 = vcmask 1047558
    %v278 = vsel %vm277, %v276, %v273
    %279 = vrot.lane.b32.xlu0 %v278, 32
    %v280 = vpop.permute.xlu0 %279
    %vm281 = vcmask 392448
    %282 = vst.msk [vmem:[#allocation0] sm:$0xf] %vm281, %v280
    %s283 = scalar_lea.vmem [#allocation0], 4
    %284 = vst.msk [vmem:[%s283] sm:$0xf0] %vm281, %v280
    %s285 = scalar_lea.vmem [#allocation1], 1
    %s286 = smov 3
    %v287 = vld [vmem:[%s285] ss:$16 sm:%s286]
    %s288 = scalar_lea.vmem [#allocation1], 1
    %s289 = smov 12
    %v290 = vld [vmem:[%s288] ss:$16 sm:%s289]
    %vm291 = vcmask 1043458
    %v292 = vsel %vm291, %v290, %v287
    %s293 = scalar_lea.vmem [#allocation1], 4294967241
    %s294 = smov 48
    %v295 = vld [vmem:[%s293] ss:$16 sm:%s294]
    %vm296 = vcmask 1045508
    %v297 = vsel %vm296, %v295, %v292
    %s298 = scalar_lea.vmem [#allocation1], 4294967241
    %s299 = smov 192
    %v300 = vld [vmem:[%s298] ss:$16 sm:%s299]
    %vm301 = vcmask 1047558
    %v302 = vsel %vm301, %v300, %v297
    %303 = vrot.lane.b32.xlu0 %v302, 16
    %v304 = vpop.permute.xlu0 %303
    %vm305 = vcmask 261248
    %306 = vst.msk [vmem:[#allocation0] sm:$0xf] %vm305, %v304
    %s307 = scalar_lea.vmem [#allocation0], 4
    %308 = vst.msk [vmem:[%s307] sm:$0xf0] %vm305, %v304
    %s310 = smul.u32 2, 2
    %s311 = sshllo.u32 0, %s310
    %s312 = sshrl.u32 %s310, 1
    %v313 = vld [vmem:[#allocation0] sm:%s311]
    %v314 = vpack.c.bf16 0.0, %v313
    %s315 = sshllo.u32 0, %s312
    %316 = vst [vmem:[%s1] sm:%s315] %v314
    %s317 = scalar_lea.vmem [#allocation0], 8
    %v318 = vld [vmem:[%s317] sm:%s311]
    %v319 = vpack.c.bf16 0.0, %v318
    %s320 = sshllo.u32 0, %s312
    %s321 = scalar_lea.vmem %s1, 2
    %322 = vst [vmem:[%s321] sm:%s320] %v319

// kernel: rcab_forward.1
$region0: #{rcab_forward.1}
  #allocation0 [shape = 'u32[]', space=smem, size = 0x4, offset = 0x4, fixed_abs, tag = 'smem constant byte address 0x4 - core index']
  #allocation1 [shape = 'u32[144,128]{1,0:T(1,128)}', space=vmem, size = 0x12000, scoped, tag = 'internal scratch']
  %s0 = inlined_call_operand.vmem [shape: f32[4,16,256], index: 0, kind: input, shape index: {}]
  %s1 = inlined_call_operand.vmem [shape: bf16[3,256,256], index: 1, kind: input, shape index: {}]
  %s2 = inlined_call_operand.vmem [shape: f32[1,256], index: 2, kind: input, shape index: {}]
  %s3 = inlined_call_operand.vmem [shape: bf16[3,256,256], index: 3, kind: input, shape index: {}]
  %s4 = inlined_call_operand.vmem [shape: f32[1,256], index: 4, kind: input, shape index: {}]
  %s5 = inlined_call_operand.vmem [shape: bf16[256,128], index: 5, kind: input, shape index: {}]
  %s6 = inlined_call_operand.vmem [shape: f32[1,128], index: 6, kind: input, shape index: {}]
  %s7 = inlined_call_operand.vmem [shape: bf16[128,256], index: 7, kind: input, shape index: {}]
  %s8 = inlined_call_operand.vmem [shape: f32[1,256], index: 8, kind: input, shape index: {}]
  %s9 = inlined_call_operand.vmem [shape: f32[4,16,256], index: 9, kind: output, shape index: {}]
  %s10 = sld [smem:[#allocation0]]
  $region69: #{rcab_forward.1} parent=0
    _
  %s12 = ssub.s32 1, %s10
  %s13 = scalar_select 0, %s12, %s10
  loop: start=0, step=1, limit=4
  $region2: #{rcab_forward.1} parent=0 // loop_pre_header
    _
  $region3: #{rcab_forward.1} parent=0 // loop_header
    %s15 = sphi 0, %s19
    %p16 = scmp.ge.s32.totalorder %s15, 4
    %s25 = sphi 0, %s27
    %s28 = sphi 0, %s25
    %s29 = sphi 0, %s28
    %s45 = sphi 0, %s29
    %s49 = sphi 0, %s49
    %s51 = sphi 0, %s49
    %s52 = sphi 0, %s51
    %s66 = sphi 0, %s52
    %s70 = sphi 0, %s70
    %s72 = sphi 0, %s70
    %s73 = sphi 0, %s72
    %s87 = sphi 0, %s73
    %s91 = sphi 0, %s91
    %s93 = sphi 0, %s91
    %s94 = sphi 0, %s93
    %s108 = sphi 0, %s94
    %s112 = sphi 0, %s112
    %s114 = sphi 0, %s112
    %s115 = sphi 0, %s114
    %s129 = sphi 0, %s115
    %s133 = sphi 0, %s133
    %s135 = sphi 0, %s133
    %s136 = sphi 0, %s135
    %s150 = sphi 0, %s136
    %s154 = sphi 0, %s154
    %s156 = sphi 0, %s154
    %s157 = sphi 0, %s156
    %s171 = sphi 0, %s157
    %s175 = sphi 0, %s175
    %s177 = sphi 0, %s175
    %s178 = sphi 0, %s177
    %s192 = sphi 0, %s178
    %s196 = sphi 0, %s196
    %s198 = sphi 0, %s196
    %s199 = sphi 0, %s198
    %s213 = sphi 0, %s199
    %s219 = sphi 0, %s221
    %s222 = sphi 0, %s219
    %s223 = sphi 0, %s222
    %s239 = sphi 0, %s223
  $region4: #{rcab_forward.1} parent=0 // loop_header_branch
    %18 = sbr.rel (%p16) target = $region8
  $region5: #{rcab_forward.1} parent=0 // loop_body
    %s20 = ssub.s32 %s15, 1
    %s21 = ssub.s32 %s15, 2
    %s22 = sadd.s32 %s15, 1
    %s23 = ssub.s32 %s15, %s22
    %p24 = scmp.eq.s32.totalorder %s23, 0
    %s26 = sadd.s32 %s25, 1
    %s27 = scalar_select %p24, %s25, %s26
    %p30 = pneg %p24
    %p31 = scmp.eq.s32.totalorder %s15, 1
    %p32 = por %p30, %p31
    %p33 = scmp.ne.s32.totalorder %s25, %s28
    %p34 = scmp.eq.s32.totalorder %s15, 0
    %p35 = por %p33, %p34
    %p36 = scmp.ne.s32.totalorder %s25, %s28
    %p37 = scmp.eq.s32.totalorder %s20, 1
    %p38 = por %p36, %p37
    %p39 = scmp.ne.s32.totalorder %s28, %s29
    %p40 = scmp.eq.s32.totalorder %s20, 0
    %p41 = por %p39, %p40
    %p42 = scmp.ne.s32.totalorder %s28, %s29
    %p43 = scmp.eq.s32.totalorder %s21, 1
    %p44 = por %p42, %p43
    %p46 = scmp.ne.s32.totalorder %s29, %s45
    %p47 = scmp.eq.s32.totalorder %s21, 0
    %p48 = por %p46, %p47
    %s50 = sadd.s32 %s49, 1
    %p53 = scmp.eq.s32.totalorder %s15, 1
    %p54 = scmp.ne.s32.totalorder %s49, %s51
    %p55 = scmp.eq.s32.totalorder %s15, 0
    %p56 = por %p54, %p55
    %p57 = scmp.ne.s32.totalorder %s49, %s51
    %p58 = scmp.eq.s32.totalorder %s20, 1
    %p59 = por %p57, %p58
    %p60 = scmp.ne.s32.totalorder %s51, %s52
    %p61 = scmp.eq.s32.totalorder %s20, 0
    %p62 = por %p60, %p61
    %p63 = scmp.ne.s32.totalorder %s51, %s52
    %p64 = scmp.eq.s32.totalorder %s21, 1
    %p65 = por %p63, %p64
    %p67 = scmp.ne.s32.totalorder %s52, %s66
    %p68 = scmp.eq.s32.totalorder %s21, 0
    %p69 = por %p67, %p68
    %s71 = sadd.s32 %s70, 1
    %p74 = scmp.eq.s32.totalorder %s15, 1
    %p75 = scmp.ne.s32.totalorder %s70, %s72
    %p76 = scmp.eq.s32.totalorder %s15, 0
    %p77 = por %p75, %p76
    %p78 = scmp.ne.s32.totalorder %s70, %s72
    %p79 = scmp.eq.s32.totalorder %s20, 1
    %p80 = por %p78, %p79
    %p81 = scmp.ne.s32.totalorder %s72, %s73
    %p82 = scmp.eq.s32.totalorder %s20, 0
    %p83 = por %p81, %p82
    %p84 = scmp.ne.s32.totalorder %s72, %s73
    %p85 = scmp.eq.s32.totalorder %s21, 1
    %p86 = por %p84, %p85
    %p88 = scmp.ne.s32.totalorder %s73, %s87
    %p89 = scmp.eq.s32.totalorder %s21, 0
    %p90 = por %p88, %p89
    %s92 = sadd.s32 %s91, 1
    %p95 = scmp.eq.s32.totalorder %s15, 1
    %p96 = scmp.ne.s32.totalorder %s91, %s93
    %p97 = scmp.eq.s32.totalorder %s15, 0
    %p98 = por %p96, %p97
    %p99 = scmp.ne.s32.totalorder %s91, %s93
    %p100 = scmp.eq.s32.totalorder %s20, 1
    %p101 = por %p99, %p100
    %p102 = scmp.ne.s32.totalorder %s93, %s94
    %p103 = scmp.eq.s32.totalorder %s20, 0
    %p104 = por %p102, %p103
    %p105 = scmp.ne.s32.totalorder %s93, %s94
    %p106 = scmp.eq.s32.totalorder %s21, 1
    %p107 = por %p105, %p106
    %p109 = scmp.ne.s32.totalorder %s94, %s108
    %p110 = scmp.eq.s32.totalorder %s21, 0
    %p111 = por %p109, %p110
    %s113 = sadd.s32 %s112, 1
    %p116 = scmp.eq.s32.totalorder %s15, 1
    %p117 = scmp.ne.s32.totalorder %s112, %s114
    %p118 = scmp.eq.s32.totalorder %s15, 0
    %p119 = por %p117, %p118
    %p120 = scmp.ne.s32.totalorder %s112, %s114
    %p121 = scmp.eq.s32.totalorder %s20, 1
    %p122 = por %p120, %p121
    %p123 = scmp.ne.s32.totalorder %s114, %s115
    %p124 = scmp.eq.s32.totalorder %s20, 0
    %p125 = por %p123, %p124
    %p126 = scmp.ne.s32.totalorder %s114, %s115
    %p127 = scmp.eq.s32.totalorder %s21, 1
    %p128 = por %p126, %p127
    %p130 = scmp.ne.s32.totalorder %s115, %s129
    %p131 = scmp.eq.s32.totalorder %s21, 0
    %p132 = por %p130, %p131
    %s134 = sadd.s32 %s133, 1
    %p137 = scmp.eq.s32.totalorder %s15, 1
    %p138 = scmp.ne.s32.totalorder %s133, %s135
    %p139 = scmp.eq.s32.totalorder %s15, 0
    %p140 = por %p138, %p139
    %p141 = scmp.ne.s32.totalorder %s133, %s135
    %p142 = scmp.eq.s32.totalorder %s20, 1
    %p143 = por %p141, %p142
    %p144 = scmp.ne.s32.totalorder %s135, %s136
    %p145 = scmp.eq.s32.totalorder %s20, 0
    %p146 = por %p144, %p145
    %p147 = scmp.ne.s32.totalorder %s135, %s136
    %p148 = scmp.eq.s32.totalorder %s21, 1
    %p149 = por %p147, %p148
    %p151 = scmp.ne.s32.totalorder %s136, %s150
    %p152 = scmp.eq.s32.totalorder %s21, 0
    %p153 = por %p151, %p152
    %s155 = sadd.s32 %s154, 1
    %p158 = scmp.eq.s32.totalorder %s15, 1
    %p159 = scmp.ne.s32.totalorder %s154, %s156
    %p160 = scmp.eq.s32.totalorder %s15, 0
    %p161 = por %p159, %p160
    %p162 = scmp.ne.s32.totalorder %s154, %s156
    %p163 = scmp.eq.s32.totalorder %s20, 1
    %p164 = por %p162, %p163
    %p165 = scmp.ne.s32.totalorder %s156, %s157
    %p166 = scmp.eq.s32.totalorder %s20, 0
    %p167 = por %p165, %p166
    %p168 = scmp.ne.s32.totalorder %s156, %s157
    %p169 = scmp.eq.s32.totalorder %s21, 1
    %p170 = por %p168, %p169
    %p172 = scmp.ne.s32.totalorder %s157, %s171
    %p173 = scmp.eq.s32.totalorder %s21, 0
    %p174 = por %p172, %p173
    %s176 = sadd.s32 %s175, 1
    %p179 = scmp.eq.s32.totalorder %s15, 1
    %p180 = scmp.ne.s32.totalorder %s175, %s177
    %p181 = scmp.eq.s32.totalorder %s15, 0
    %p182 = por %p180, %p181
    %p183 = scmp.ne.s32.totalorder %s175, %s177
    %p184 = scmp.eq.s32.totalorder %s20, 1
    %p185 = por %p183, %p184
    %p186 = scmp.ne.s32.totalorder %s177, %s178
    %p187 = scmp.eq.s32.totalorder %s20, 0
    %p188 = por %p186, %p187
    %p189 = scmp.ne.s32.totalorder %s177, %s178
    %p190 = scmp.eq.s32.totalorder %s21, 1
    %p191 = por %p189, %p190
    %p193 = scmp.ne.s32.totalorder %s178, %s192
    %p194 = scmp.eq.s32.totalorder %s21, 0
    %p195 = por %p193, %p194
    %s197 = sadd.s32 %s196, 1
    %p200 = scmp.eq.s32.totalorder %s15, 1
    %p201 = scmp.ne.s32.totalorder %s196, %s198
    %p202 = scmp.eq.s32.totalorder %s15, 0
    %p203 = por %p201, %p202
    %p204 = scmp.ne.s32.totalorder %s196, %s198
    %p205 = scmp.eq.s32.totalorder %s20, 1
    %p206 = por %p204, %p205
    %p207 = scmp.ne.s32.totalorder %s198, %s199
    %p208 = scmp.eq.s32.totalorder %s20, 0
    %p209 = por %p207, %p208
    %p210 = scmp.ne.s32.totalorder %s198, %s199
    %p211 = scmp.eq.s32.totalorder %s21, 1
    %p212 = por %p210, %p211
    %p214 = scmp.ne.s32.totalorder %s199, %s213
    %p215 = scmp.eq.s32.totalorder %s21, 0
    %p216 = por %p214, %p215
    %s217 = ssub.s32 %s15, %s22
    %p218 = scmp.eq.s32.totalorder %s217, 0
    %s220 = sadd.s32 %s219, 1
    %s221 = scalar_select %p218, %s219, %s220
    %p224 = pneg %p218
    %p225 = scmp.eq.s32.totalorder %s15, 1
    %p226 = por %p224, %p225
    %p227 = scmp.ne.s32.totalorder %s219, %s222
    %p228 = scmp.eq.s32.totalorder %s15, 0
    %p229 = por %p227, %p228
    %p230 = scmp.ne.s32.totalorder %s219, %s222
    %p231 = scmp.eq.s32.totalorder %s20, 1
    %p232 = por %p230, %p231
    %p233 = scmp.ne.s32.totalorder %s222, %s223
    %p234 = scmp.eq.s32.totalorder %s20, 0
    %p235 = por %p233, %p234
    %p236 = scmp.ne.s32.totalorder %s222, %s223
    %p237 = scmp.eq.s32.totalorder %s21, 1
    %p238 = por %p236, %p237
    %p240 = scmp.ne.s32.totalorder %s223, %s239
    %p241 = scmp.eq.s32.totalorder %s21, 0
    %p242 = por %p240, %p241
    %p243 = scmp.le.s32.totalorder 1, %s15
    %p244 = scmp.lt.s32.totalorder %s15, 3
    %p245 = pnand %p243, %p244
    %p246 = pneg %p245
    // Predicated region
    $region9: #{rcab_forward.1} parent=5 // pred_check
      _
    $region10: #{rcab_forward.1} parent=5 // pred_check_branch
      %248 = sbr.rel (%p245) target = $region12
    $region11: #{rcab_forward.1} parent=5 // pred_region
      %s249 = ssub.s32 %s15, 1
      // Predicated region
      $region13: #{rcab_forward.1} parent=11 // pred_check
        %p250 = pneg %p62
      $region14: #{rcab_forward.1} parent=11 // pred_check_branch
        %252 = sbr.rel (%p250) target = $region16
      $region15: #{rcab_forward.1} parent=11 // pred_region
        _
      $region16: #{rcab_forward.1} parent=11 // pred_fallthru
        _
      // Predicated region
      $region17: #{rcab_forward.1} parent=11 // pred_check
        %p253 = pneg %p83
      $region18: #{rcab_forward.1} parent=11 // pred_check_branch
        %255 = sbr.rel (%p253) target = $region20
      $region19: #{rcab_forward.1} parent=11 // pred_region
        _
      $region20: #{rcab_forward.1} parent=11 // pred_fallthru
        _
      // Predicated region
      $region21: #{rcab_forward.1} parent=11 // pred_check
        %p256 = pneg %p104
      $region22: #{rcab_forward.1} parent=11 // pred_check_branch
        %258 = sbr.rel (%p256) target = $region24
      $region23: #{rcab_forward.1} parent=11 // pred_region
        _
      $region24: #{rcab_forward.1} parent=11 // pred_fallthru
        _
      // Predicated region
      $region25: #{rcab_forward.1} parent=11 // pred_check
        %p259 = pneg %p125
      $region26: #{rcab_forward.1} parent=11 // pred_check_branch
        %261 = sbr.rel (%p259) target = $region28
      $region27: #{rcab_forward.1} parent=11 // pred_region
        _
      $region28: #{rcab_forward.1} parent=11 // pred_fallthru
        _
      // Predicated region
      $region29: #{rcab_forward.1} parent=11 // pred_check
        %p262 = pneg %p146
      $region30: #{rcab_forward.1} parent=11 // pred_check_branch
        %264 = sbr.rel (%p262) target = $region32
      $region31: #{rcab_forward.1} parent=11 // pred_region
        _
      $region32: #{rcab_forward.1} parent=11 // pred_fallthru
        _
      // Predicated region
      $region33: #{rcab_forward.1} parent=11 // pred_check
        %p265 = pneg %p167
      $region34: #{rcab_forward.1} parent=11 // pred_check_branch
        %267 = sbr.rel (%p265) target = $region36
      $region35: #{rcab_forward.1} parent=11 // pred_region
        _
      $region36: #{rcab_forward.1} parent=11 // pred_fallthru
        _
      // Predicated region
      $region37: #{rcab_forward.1} parent=11 // pred_check
        %p268 = pneg %p188
      $region38: #{rcab_forward.1} parent=11 // pred_check_branch
        %270 = sbr.rel (%p268) target = $region40
      $region39: #{rcab_forward.1} parent=11 // pred_region
        _
      $region40: #{rcab_forward.1} parent=11 // pred_fallthru
        _
      // Predicated region
      $region41: #{rcab_forward.1} parent=11 // pred_check
        %p271 = pneg %p209
      $region42: #{rcab_forward.1} parent=11 // pred_check_branch
        %273 = sbr.rel (%p271) target = $region44
      $region43: #{rcab_forward.1} parent=11 // pred_region
        _
      $region44: #{rcab_forward.1} parent=11 // pred_fallthru
        _
    $region12: #{rcab_forward.1} parent=5 // pred_fallthru
      _
    %p274 = scmp.lt.s32.totalorder %s15, 2
    // Predicated region
    $region45: #{rcab_forward.1} parent=5 // pred_check
      %p275 = pneg %p274
    $region46: #{rcab_forward.1} parent=5 // pred_check_branch
      %277 = sbr.rel (%p275) target = $region48
    $region47: #{rcab_forward.1} parent=5 // pred_region
      // Predicated region
      $region49: #{rcab_forward.1} parent=47 // pred_check
        %p278 = pneg %p35
      $region50: #{rcab_forward.1} parent=47 // pred_check_branch
        %280 = sbr.rel (%p278) target = $region52
      $region51: #{rcab_forward.1} parent=47 // pred_region
        %s281 = smul.u32 2, %s15
        %p282 = scmp.lt.s32.totalorder %s281, 3
        %s283 = scalar_select %p282, %s281, 3
        %s284 = smul.addr %s283, 4
        %s285 = smul.addr %s284, 8
        %s286 = scalar_lea.vmem %s0, %s285
        %s287 = smul.u32 2, %s15
      $region52: #{rcab_forward.1} parent=47 // pred_fallthru
        _
    $region48: #{rcab_forward.1} parent=5 // pred_fallthru
      _
    %p288 = scmp.le.s32.totalorder 1, %s15
    %p289 = scmp.lt.s32.totalorder %s15, 3
    %p290 = pnand %p288, %p289
    %p291 = pneg %p290
    // Predicated region
    $region53: #{rcab_forward.1} parent=5 // pred_check
      _
    $region54: #{rcab_forward.1} parent=5 // pred_check_branch
      %293 = sbr.rel (%p290) target = $region56
    $region55: #{rcab_forward.1} parent=5 // pred_region
      %s294 = ssub.s32 %s15, 1
      %s295 = smul.u32 2, %s20
      %p296 = scmp.lt.s32.totalorder %s295, 3
      %s297 = scalar_select %p296, %s295, 3
      %s298 = smul.addr %s297, 4
      %s299 = smul.addr %s298, 8
      %s300 = scalar_lea.vmem %s0, %s299
      %p301 = pneg %p41
      %p302 = pneg %p38
      %p303 = pneg %p62
      %p304 = pneg %p59
      %p305 = pneg %p83
      %p306 = pneg %p80
      %p307 = pneg %p104
      %p308 = pneg %p101
      %p309 = pneg %p125
      %p310 = pneg %p122
      %p311 = pneg %p146
      %p312 = pneg %p143
      %p313 = pneg %p167
      %p314 = pneg %p164
      %p315 = pneg %p188
      %p316 = pneg %p185
      %p317 = pneg %p209
      %p318 = pneg %p206
      %p319 = pneg %p235
      %p320 = pneg %p232
      %s321 = smul.u32 2, %s20
      %p322 = scmp.lt.s32.totalorder %s321, 3
      %s323 = scalar_select %p322, %s321, 3
      %s324 = smul.addr %s323, 4
      %s325 = smul.addr %s324, 8
      %s326 = scalar_lea.vmem %s9, %s325
      %s327 = smul.u32 2, %s20
      %p328 = scmp.lt.s32.totalorder %s327, 3
      %s329 = scalar_select %p328, %s327, 3
      %s330 = smul.addr %s329, 4
      %s331 = smul.addr %s330, 8
      %s332 = scalar_lea.vmem %s0, %s331
      %s333 = smul.u32 2, %s20
      %s334 = smul.u32 2, %s20
      %p335 = scmp.lt.s32.totalorder %s334, 3
      %s336 = scalar_select %p335, %s334, 3
      %s337 = smul.addr %s336, 4
      %s338 = smul.addr %s337, 8
      %s339 = scalar_lea.vmem %s9, %s338
      %s340 = smul.u32 2, %s20
      %v342 = vld [vmem:[%s332] sm:$0xff]
      %v343 = vld [vmem:[%s332 + $0x8] sm:$0xff]
      %v344 = vld [vmem:[%s332 + $0x10] sm:$0xff]
      %v345 = vld [vmem:[%s332 + $0x18] sm:$0xff]
      %v346 = vld [vmem:[%s332 + $0x20] sm:$0xff]
      %v347 = vld [vmem:[%s332 + $0x28] sm:$0xff]
      %v348 = vld [vmem:[%s332 + $0x30] sm:$0xff]
      %v349 = vld [vmem:[%s332 + $0x38] sm:$0xff]
      %v350 = vlaneseq
      %v351 = vshrl.u32 %v350, 7
      %v352 = vadd.s32 %v351, 8
      %v353 = vadd.s32 %v351, 16
      %v354 = vadd.s32 %v351, 24
      %vm355 = vcmp.lt.s32.totalorder %v351, 0
      %v356 = vsub.s32 0, %v351
      %v357 = vsel %vm355, %v356, %v351
      %v358 = vshrl.u32 %v357, 4
      %v359 = vand.u32 %v357, 15
      %v360 = vsub.s32 0, %v359
      %v361 = vsel %vm355, %v360, %v359
      %vm362 = vcmp.lt.s32.totalorder %v352, 0
      %v363 = vsub.s32 0, %v352
      %v364 = vsel %vm362, %v363, %v352
      %v365 = vshrl.u32 %v364, 4
      %v366 = vand.u32 %v364, 15
      %v367 = vsub.s32 0, %v366
      %v368 = vsel %vm362, %v367, %v366
      %vm369 = vcmp.lt.s32.totalorder %v353, 0
      %v370 = vsub.s32 0, %v353
      %v371 = vsel %vm369, %v370, %v353
      %v372 = vshrl.u32 %v371, 4
      %v373 = vand.u32 %v371, 15
      %v374 = vsub.s32 0, %v373
      %v375 = vsel %vm369, %v374, %v373
      %vm376 = vcmp.lt.s32.totalorder %v354, 0
      %v377 = vsub.s32 0, %v354
      %v378 = vsel %vm376, %v377, %v354
      %v379 = vshrl.u32 %v378, 4
      %v380 = vand.u32 %v378, 15
      %v381 = vsub.s32 0, %v380
      %v382 = vsel %vm376, %v381, %v380
      %vm383 = vcmp.ne.s32.totalorder %v361, 0
      %vm384 = vcmp.ne.s32.totalorder %v368, 0
      %vm385 = vcmp.ne.s32.totalorder %v375, 0
      %vm386 = vcmp.ne.s32.totalorder %v382, 0
      %vm387 = vcmp.lt.s32.totalorder %v361, 0
      %vm388 = vcmp.lt.s32.totalorder %v368, 0
      %vm389 = vcmp.lt.s32.totalorder %v375, 0
      %vm390 = vcmp.lt.s32.totalorder %v382, 0
      %vm391 = vmand %vm387, %vm383
      %vm392 = vmand %vm388, %vm384
      %vm393 = vmand %vm389, %vm385
      %vm394 = vmand %vm390, %vm386
      %v395 = vadd.s32 %v361, 16
      %v396 = vadd.s32 %v368, 16
      %v397 = vadd.s32 %v375, 16
      %v398 = vadd.s32 %v382, 16
      %v399 = vsel %vm391, %v395, %v361
      %v400 = vsel %vm392, %v396, %v368
      %v401 = vsel %vm393, %v397, %v375
      %v402 = vsel %vm394, %v398, %v382
      %v403 = vld [vmem:[%s2] sm:$0x3]
      %v404 = vpack.c.bf16 %v344, %v342
      %v405 = vpack.c.bf16 %v345, %v343
      %v406 = vpack.c.bf16 %v348, %v346
      %v407 = vpack.c.bf16 %v349, %v347
      %v408 = vld [vmem:[%s1] sm:$0xff]
      %v409 = vld [vmem:[%s1 + $0x8] sm:$0xff]
      %v410 = vld [vmem:[%s1 + $0x10] sm:$0xff]
      %v411 = vld [vmem:[%s1 + $0x18] sm:$0xff]
      %v412 = vld [vmem:[%s1 + $0x20] sm:$0xff]
      %v413 = vld [vmem:[%s1 + $0x28] sm:$0xff]
      %v414 = vld [vmem:[%s1 + $0x30] sm:$0xff]
      %v415 = vld [vmem:[%s1 + $0x38] sm:$0xff]
      %v416 = vld [vmem:[%s1 + $0x40] sm:$0xff]
      %v417 = vld [vmem:[%s1 + $0x48] sm:$0xff]
      %v418 = vld [vmem:[%s1 + $0x50] sm:$0xff]
      %v419 = vld [vmem:[%s1 + $0x58] sm:$0xff]
      %v420 = vld [vmem:[%s1 + $0x60] sm:$0xff]
      %v421 = vld [vmem:[%s1 + $0x68] sm:$0xff]
      %v422 = vld [vmem:[%s1 + $0x70] sm:$0xff]
      %v423 = vld [vmem:[%s1 + $0x78] sm:$0xff]
      %v424 = vld [vmem:[%s1 + $0x80] sm:$0xff]
      %v425 = vld [vmem:[%s1 + $0x88] sm:$0xff]
      %v426 = vld [vmem:[%s1 + $0x90] sm:$0xff]
      %v427 = vld [vmem:[%s1 + $0x98] sm:$0xff]
      %v428 = vld [vmem:[%s1 + $0xa0] sm:$0xff]
      %v429 = vld [vmem:[%s1 + $0xa8] sm:$0xff]
      %v430 = vld [vmem:[%s1 + $0xb0] sm:$0xff]
      %v431 = vld [vmem:[%s1 + $0xb8] sm:$0xff]
      %v432 = vld [vmem:[%s1 + $0xc0] sm:$0xff]
      %v433 = vld [vmem:[%s1 + $0xc8] sm:$0xff]
      %v434 = vld [vmem:[%s1 + $0xd0] sm:$0xff]
      %v435 = vld [vmem:[%s1 + $0xd8] sm:$0xff]
      %v436 = vld [vmem:[%s1 + $0xe0] sm:$0xff]
      %v437 = vld [vmem:[%s1 + $0xe8] sm:$0xff]
      %v438 = vld [vmem:[%s1 + $0xf0] sm:$0xff]
      %v439 = vld [vmem:[%s1 + $0xf8] sm:$0xff]
      %v472 = vunpack.c.l.b16 %v408
      %v473 = vunpack.c.h.b16 %v408
      %v474 = vunpack.c.l.b16 %v409
      %v475 = vunpack.c.h.b16 %v409
      %v476 = vunpack.c.l.b16 %v410
      %v477 = vunpack.c.h.b16 %v410
      %v478 = vunpack.c.l.b16 %v411
      %v479 = vunpack.c.h.b16 %v411
      %v480 = vunpack.c.l.b16 %v412
      %v481 = vunpack.c.h.b16 %v412
      %v482 = vunpack.c.l.b16 %v413
      %v483 = vunpack.c.h.b16 %v413
      %v484 = vunpack.c.l.b16 %v414
      %v485 = vunpack.c.h.b16 %v414
      %v486 = vunpack.c.l.b16 %v415
      %v487 = vunpack.c.h.b16 %v415
      %v488 = vunpack.c.l.b16 %v416
      %v489 = vunpack.c.h.b16 %v416
      %v490 = vunpack.c.l.b16 %v417
      %v491 = vunpack.c.h.b16 %v417
      %v492 = vunpack.c.l.b16 %v418
      %v493 = vunpack.c.h.b16 %v418
      %v494 = vunpack.c.l.b16 %v419
      %v495 = vunpack.c.h.b16 %v419
      %v496 = vunpack.c.l.b16 %v420
      %v497 = vunpack.c.h.b16 %v420
      %v498 = vunpack.c.l.b16 %v421
      %v499 = vunpack.c.h.b16 %v421
      %v500 = vunpack.c.l.b16 %v422
      %v501 = vunpack.c.h.b16 %v422
      %v502 = vunpack.c.l.b16 %v423
      %v503 = vunpack.c.h.b16 %v423
      %v504 = vunpack.c.l.b16 %v424
      %v505 = vunpack.c.h.b16 %v424
      %v506 = vunpack.c.l.b16 %v425
      %v507 = vunpack.c.h.b16 %v425
      %v508 = vunpack.c.l.b16 %v426
      %v509 = vunpack.c.h.b16 %v426
      %v510 = vunpack.c.l.b16 %v427
      %v511 = vunpack.c.h.b16 %v427
      %v512 = vunpack.c.l.b16 %v428
      %v513 = vunpack.c.h.b16 %v428
      %v514 = vunpack.c.l.b16 %v429
      %v515 = vunpack.c.h.b16 %v429
      %v516 = vunpack.c.l.b16 %v430
      %v517 = vunpack.c.h.b16 %v430
      %v518 = vunpack.c.l.b16 %v431
      %v519 = vunpack.c.h.b16 %v431
      %v520 = vunpack.c.l.b16 %v432
      %v521 = vunpack.c.h.b16 %v432
      %v522 = vunpack.c.l.b16 %v433
      %v523 = vunpack.c.h.b16 %v433
      %v524 = vunpack.c.l.b16 %v434
      %v525 = vunpack.c.h.b16 %v434
      %v526 = vunpack.c.l.b16 %v435
      %v527 = vunpack.c.h.b16 %v435
      %v528 = vunpack.c.l.b16 %v436
      %v529 = vunpack.c.h.b16 %v436
      %v530 = vunpack.c.l.b16 %v437
      %v531 = vunpack.c.h.b16 %v437
      %v532 = vunpack.c.l.b16 %v438
      %v533 = vunpack.c.h.b16 %v438
      %v534 = vunpack.c.l.b16 %v439
      %v535 = vunpack.c.h.b16 %v439
      %v536 = vpack.c.b16 %v474, %v472
      %v537 = vpack.c.b16 %v475, %v473
      %v538 = vpack.c.b16 %v478, %v476
      %v539 = vpack.c.b16 %v479, %v477
      %v540 = vpack.c.b16 %v482, %v480
      %v541 = vpack.c.b16 %v483, %v481
      %v542 = vpack.c.b16 %v486, %v484
      %v543 = vpack.c.b16 %v487, %v485
      %v544 = vpack.c.b16 %v490, %v488
      %v545 = vpack.c.b16 %v491, %v489
      %v546 = vpack.c.b16 %v494, %v492
      %v547 = vpack.c.b16 %v495, %v493
      %v548 = vpack.c.b16 %v498, %v496
      %v549 = vpack.c.b16 %v499, %v497
      %v550 = vpack.c.b16 %v502, %v500
      %v551 = vpack.c.b16 %v503, %v501
      %v552 = vpack.c.b16 %v506, %v504
      %v553 = vpack.c.b16 %v507, %v505
      %v554 = vpack.c.b16 %v510, %v508
      %v555 = vpack.c.b16 %v511, %v509
      %v556 = vpack.c.b16 %v514, %v512
      %v557 = vpack.c.b16 %v515, %v513
      %v558 = vpack.c.b16 %v518, %v516
      %v559 = vpack.c.b16 %v519, %v517
      %v560 = vpack.c.b16 %v522, %v520
      %v561 = vpack.c.b16 %v523, %v521
      %v562 = vpack.c.b16 %v526, %v524
      %v563 = vpack.c.b16 %v527, %v525
      %v564 = vpack.c.b16 %v530, %v528
      %v565 = vpack.c.b16 %v531, %v529
      %v566 = vpack.c.b16 %v534, %v532
      %v567 = vpack.c.b16 %v535, %v533
      %600 = vmatprep.subr.bf16.mxu0 %v537
      %601 = vmatpush1.bf16.msra.mxu0 %v536
      %602 = vmatprep.subr.bf16.mxu0 %v539
      %603 = vmatpush1.bf16.msra.mxu0 %v538
      %604 = vmatprep.subr.bf16.mxu0 %v541
      %605 = vmatpush1.bf16.msra.mxu0 %v540
      %606 = vmatprep.subr.bf16.mxu0 %v543
      %607 = vmatpush1.bf16.msra.mxu0 %v542
      %608 = vmatprep.subr.bf16.mxu0 %v545
      %609 = vmatpush1.bf16.msra.mxu0 %v544
      %610 = vmatprep.subr.bf16.mxu0 %v547
      %611 = vmatpush1.bf16.msra.mxu0 %v546
      %612 = vmatprep.subr.bf16.mxu0 %v549
      %613 = vmatpush1.bf16.msra.mxu0 %v548
      %614 = vmatprep.subr.bf16.mxu0 %v551
      %615 = vmatpush1.bf16.msra.mxu0 %v550
      %616 = vmatprep.subr.bf16.mxu0 %v553
      %617 = vmatpush1.bf16.msra.mxu0 %v552
      %618 = vmatprep.subr.bf16.mxu0 %v555
      %619 = vmatpush1.bf16.msra.mxu0 %v554
      %620 = vmatprep.subr.bf16.mxu0 %v557
      %621 = vmatpush1.bf16.msra.mxu0 %v556
      %622 = vmatprep.subr.bf16.mxu0 %v559
      %623 = vmatpush1.bf16.msra.mxu0 %v558
      %624 = vmatprep.subr.bf16.mxu0 %v561
      %625 = vmatpush1.bf16.msra.mxu0 %v560
      %626 = vmatprep.subr.bf16.mxu0 %v563
      %627 = vmatpush1.bf16.msra.mxu0 %v562
      %628 = vmatprep.subr.bf16.mxu0 %v565
      %629 = vmatpush1.bf16.msra.mxu0 %v564
      %630 = vmatprep.subr.bf16.mxu0 %v567
      %631 = vmatpush1.bf16.msra.mxu0 %v566
      %632 = vmatprep.mubr.bf16.mxu0 %v405
      %633 = vmatmul.mubr.bf16.gmra.mrb[0].mxu0 %v404
      %v634 = vpop.f32.mrb[0].mxu0
      %v635 = vadd.f32 0.0, %v634
      %v636 = vpop.f32.mrb[0].mxu0
      %v637 = vadd.f32 0.0, %v636
      %v638 = vpop.f32.mrb[0].mxu0
      %v639 = vadd.f32 0.0, %v638
      %v640 = vpop.f32.mrb[0].mxu0
      %v641 = vadd.f32 0.0, %v640
      %642 = vmatprep.mubr.bf16.mxu0 %v407
      %643 = vmatmul.mubr.bf16.gmra.mrb[0].mxu0 %v406
      %v644 = vpop.f32.mrb[0].mxu0
      %v645 = vadd.f32 0.0, %v644
      %v646 = vpop.f32.mrb[0].mxu0
      %v647 = vadd.f32 0.0, %v646
      %v648 = vpop.f32.mrb[0].mxu0
      %v649 = vadd.f32 0.0, %v648
      %v650 = vpop.f32.mrb[0].mxu0
      %v651 = vadd.f32 0.0, %v650
      %652 = vdwg.mxu0
      %s653 = scalar_lea.vmem %s1, 256
      %v654 = vld [vmem:[%s653] sm:$0xff]
      %v655 = vld [vmem:[%s653 + $0x8] sm:$0xff]
      %v656 = vld [vmem:[%s653 + $0x10] sm:$0xff]
      %v657 = vld [vmem:[%s653 + $0x18] sm:$0xff]
      %v658 = vld [vmem:[%s653 + $0x20] sm:$0xff]
      %v659 = vld [vmem:[%s653 + $0x28] sm:$0xff]
      %v660 = vld [vmem:[%s653 + $0x30] sm:$0xff]
      %v661 = vld [vmem:[%s653 + $0x38] sm:$0xff]
      %v662 = vld [vmem:[%s653 + $0x40] sm:$0xff]
      %v663 = vld [vmem:[%s653 + $0x48] sm:$0xff]
      %v664 = vld [vmem:[%s653 + $0x50] sm:$0xff]
      %v665 = vld [vmem:[%s653 + $0x58] sm:$0xff]
      %v666 = vld [vmem:[%s653 + $0x60] sm:$0xff]
      %v667 = vld [vmem:[%s653 + $0x68] sm:$0xff]
      %v668 = vld [vmem:[%s653 + $0x70] sm:$0xff]
      %v669 = vld [vmem:[%s653 + $0x78] sm:$0xff]
      %v670 = vld [vmem:[%s653 + $0x80] sm:$0xff]
      %v671 = vld [vmem:[%s653 + $0x88] sm:$0xff]
      %v672 = vld [vmem:[%s653 + $0x90] sm:$0xff]
      %v673 = vld [vmem:[%s653 + $0x98] sm:$0xff]
      %v674 = vld [vmem:[%s653 + $0xa0] sm:$0xff]
      %v675 = vld [vmem:[%s653 + $0xa8] sm:$0xff]
      %v676 = vld [vmem:[%s653 + $0xb0] sm:$0xff]
      %v677 = vld [vmem:[%s653 + $0xb8] sm:$0xff]
      %v678 = vld [vmem:[%s653 + $0xc0] sm:$0xff]
      %v679 = vld [vmem:[%s653 + $0xc8] sm:$0xff]
      %v680 = vld [vmem:[%s653 + $0xd0] sm:$0xff]
      %v681 = vld [vmem:[%s653 + $0xd8] sm:$0xff]
      %v682 = vld [vmem:[%s653 + $0xe0] sm:$0xff]
      %v683 = vld [vmem:[%s653 + $0xe8] sm:$0xff]
      %v684 = vld [vmem:[%s653 + $0xf0] sm:$0xff]
      %v685 = vld [vmem:[%s653 + $0xf8] sm:$0xff]
      %s686 = scalar_lea.vmem %s1, 512
      %v687 = vld [vmem:[%s686] sm:$0xff]
      %v688 = vld [vmem:[%s686 + $0x8] sm:$0xff]
      %v689 = vld [vmem:[%s686 + $0x10] sm:$0xff]
      %v690 = vld [vmem:[%s686 + $0x18] sm:$0xff]
      %v691 = vld [vmem:[%s686 + $0x20] sm:$0xff]
      %v692 = vld [vmem:[%s686 + $0x28] sm:$0xff]
      %v693 = vld [vmem:[%s686 + $0x30] sm:$0xff]
      %v694 = vld [vmem:[%s686 + $0x38] sm:$0xff]
      %v695 = vld [vmem:[%s686 + $0x40] sm:$0xff]
      %v696 = vld [vmem:[%s686 + $0x48] sm:$0xff]
      %v697 = vld [vmem:[%s686 + $0x50] sm:$0xff]
      %v698 = vld [vmem:[%s686 + $0x58] sm:$0xff]
      %v699 = vld [vmem:[%s686 + $0x60] sm:$0xff]
      %v700 = vld [vmem:[%s686 + $0x68] sm:$0xff]
      %v701 = vld [vmem:[%s686 + $0x70] sm:$0xff]
      %v702 = vld [vmem:[%s686 + $0x78] sm:$0xff]
      %v703 = vld [vmem:[%s686 + $0x80] sm:$0xff]
      %v704 = vld [vmem:[%s686 + $0x88] sm:$0xff]
      %v705 = vld [vmem:[%s686 + $0x90] sm:$0xff]
      %v706 = vld [vmem:[%s686 + $0x98] sm:$0xff]
      %v707 = vld [vmem:[%s686 + $0xa0] sm:$0xff]
      %v708 = vld [vmem:[%s686 + $0xa8] sm:$0xff]
      %v709 = vld [vmem:[%s686 + $0xb0] sm:$0xff]
      %v710 = vld [vmem:[%s686 + $0xb8] sm:$0xff]
      %v711 = vld [vmem:[%s686 + $0xc0] sm:$0xff]
      %v712 = vld [vmem:[%s686 + $0xc8] sm:$0xff]
      %v713 = vld [vmem:[%s686 + $0xd0] sm:$0xff]
      %v714 = vld [vmem:[%s686 + $0xd8] sm:$0xff]
      %v715 = vld [vmem:[%s686 + $0xe0] sm:$0xff]
      %v716 = vld [vmem:[%s686 + $0xe8] sm:$0xff]
      %v717 = vld [vmem:[%s686 + $0xf0] sm:$0xff]
      %v718 = vld [vmem:[%s686 + $0xf8] sm:$0xff]
      %v751 = vunpack.c.l.b16 %v687
      %v752 = vunpack.c.h.b16 %v687
      %v753 = vunpack.c.l.b16 %v688
      %v754 = vunpack.c.h.b16 %v688
      %v755 = vunpack.c.l.b16 %v689
      %v756 = vunpack.c.h.b16 %v689
      %v757 = vunpack.c.l.b16 %v690
      %v758 = vunpack.c.h.b16 %v690
      %v759 = vunpack.c.l.b16 %v691
      %v760 = vunpack.c.h.b16 %v691
      %v761 = vunpack.c.l.b16 %v692
      %v762 = vunpack.c.h.b16 %v692
      %v763 = vunpack.c.l.b16 %v693
      %v764 = vunpack.c.h.b16 %v693
      %v765 = vunpack.c.l.b16 %v694
      %v766 = vunpack.c.h.b16 %v694
      %v767 = vunpack.c.l.b16 %v695
      %v768 = vunpack.c.h.b16 %v695
      %v769 = vunpack.c.l.b16 %v696
      %v770 = vunpack.c.h.b16 %v696
      %v771 = vunpack.c.l.b16 %v697
      %v772 = vunpack.c.h.b16 %v697
      %v773 = vunpack.c.l.b16 %v698
      %v774 = vunpack.c.h.b16 %v698
      %v775 = vunpack.c.l.b16 %v699
      %v776 = vunpack.c.h.b16 %v699
      %v777 = vunpack.c.l.b16 %v700
      %v778 = vunpack.c.h.b16 %v700
      %v779 = vunpack.c.l.b16 %v701
      %v780 = vunpack.c.h.b16 %v701
      %v781 = vunpack.c.l.b16 %v702
      %v782 = vunpack.c.h.b16 %v702
      %v783 = vunpack.c.l.b16 %v703
      %v784 = vunpack.c.h.b16 %v703
      %v785 = vunpack.c.l.b16 %v704
      %v786 = vunpack.c.h.b16 %v704
      %v787 = vunpack.c.l.b16 %v705
      %v788 = vunpack.c.h.b16 %v705
      %v789 = vunpack.c.l.b16 %v706
      %v790 = vunpack.c.h.b16 %v706
      %v791 = vunpack.c.l.b16 %v707
      %v792 = vunpack.c.h.b16 %v707
      %v793 = vunpack.c.l.b16 %v708
      %v794 = vunpack.c.h.b16 %v708
      %v795 = vunpack.c.l.b16 %v709
      %v796 = vunpack.c.h.b16 %v709
      %v797 = vunpack.c.l.b16 %v710
      %v798 = vunpack.c.h.b16 %v710
      %v799 = vunpack.c.l.b16 %v711
      %v800 = vunpack.c.h.b16 %v711
      %v801 = vunpack.c.l.b16 %v712
      %v802 = vunpack.c.h.b16 %v712
      %v803 = vunpack.c.l.b16 %v713
      %v804 = vunpack.c.h.b16 %v713
      %v805 = vunpack.c.l.b16 %v714
      %v806 = vunpack.c.h.b16 %v714
      %v807 = vunpack.c.l.b16 %v715
      %v808 = vunpack.c.h.b16 %v715
      %v809 = vunpack.c.l.b16 %v716
      %v810 = vunpack.c.h.b16 %v716
      %v811 = vunpack.c.l.b16 %v717
      %v812 = vunpack.c.h.b16 %v717
      %v813 = vunpack.c.l.b16 %v718
      %v814 = vunpack.c.h.b16 %v718
      %v815 = vpack.c.b16 %v753, %v751
      %v816 = vpack.c.b16 %v754, %v752
      %v817 = vpack.c.b16 %v757, %v755
      %v818 = vpack.c.b16 %v758, %v756
      %v819 = vpack.c.b16 %v761, %v759
      %v820 = vpack.c.b16 %v762, %v760
      %v821 = vpack.c.b16 %v765, %v763
      %v822 = vpack.c.b16 %v766, %v764
      %v823 = vpack.c.b16 %v769, %v767
      %v824 = vpack.c.b16 %v770, %v768
      %v825 = vpack.c.b16 %v773, %v771
      %v826 = vpack.c.b16 %v774, %v772
      %v827 = vpack.c.b16 %v777, %v775
      %v828 = vpack.c.b16 %v778, %v776
      %v829 = vpack.c.b16 %v781, %v779
      %v830 = vpack.c.b16 %v782, %v780
      %v831 = vpack.c.b16 %v785, %v783
      %v832 = vpack.c.b16 %v786, %v784
      %v833 = vpack.c.b16 %v789, %v787
      %v834 = vpack.c.b16 %v790, %v788
      %v835 = vpack.c.b16 %v793, %v791
      %v836 = vpack.c.b16 %v794, %v792
      %v837 = vpack.c.b16 %v797, %v795
      %v838 = vpack.c.b16 %v798, %v796
      %v839 = vpack.c.b16 %v801, %v799
      %v840 = vpack.c.b16 %v802, %v800
      %v841 = vpack.c.b16 %v805, %v803
      %v842 = vpack.c.b16 %v806, %v804
      %v843 = vpack.c.b16 %v809, %v807
      %v844 = vpack.c.b16 %v810, %v808
      %v845 = vpack.c.b16 %v813, %v811
      %v846 = vpack.c.b16 %v814, %v812
      %879 = vmatprep.subr.bf16.mxu0 %v816
      %880 = vmatpush1.bf16.msra.mxu0 %v815
      %881 = vmatprep.subr.bf16.mxu0 %v818
      %882 = vmatpush1.bf16.msra.mxu0 %v817
      %883 = vmatprep.subr.bf16.mxu0 %v820
      %884 = vmatpush1.bf16.msra.mxu0 %v819
      %885 = vmatprep.subr.bf16.mxu0 %v822
      %886 = vmatpush1.bf16.msra.mxu0 %v821
      %887 = vmatprep.subr.bf16.mxu0 %v824
      %888 = vmatpush1.bf16.msra.mxu0 %v823
      %889 = vmatprep.subr.bf16.mxu0 %v826
      %890 = vmatpush1.bf16.msra.mxu0 %v825
      %891 = vmatprep.subr.bf16.mxu0 %v828
      %892 = vmatpush1.bf16.msra.mxu0 %v827
      %893 = vmatprep.subr.bf16.mxu0 %v830
      %894 = vmatpush1.bf16.msra.mxu0 %v829
      %895 = vmatprep.subr.bf16.mxu0 %v832
      %896 = vmatpush1.bf16.msra.mxu0 %v831
      %897 = vmatprep.subr.bf16.mxu0 %v834
      %898 = vmatpush1.bf16.msra.mxu0 %v833
      %899 = vmatprep.subr.bf16.mxu0 %v836
      %900 = vmatpush1.bf16.msra.mxu0 %v835
      %901 = vmatprep.subr.bf16.mxu0 %v838
      %902 = vmatpush1.bf16.msra.mxu0 %v837
      %903 = vmatprep.subr.bf16.mxu0 %v840
      %904 = vmatpush1.bf16.msra.mxu0 %v839
      %905 = vmatprep.subr.bf16.mxu0 %v842
      %906 = vmatpush1.bf16.msra.mxu0 %v841
      %907 = vmatprep.subr.bf16.mxu0 %v844
      %908 = vmatpush1.bf16.msra.mxu0 %v843
      %909 = vmatprep.subr.bf16.mxu0 %v846
      %910 = vmatpush1.bf16.msra.mxu0 %v845
      %911 = vmatprep.mubr.bf16.mxu0 %v405
      %912 = vmatmul.mubr.bf16.gmra.mrb[0].mxu0 %v404
      %v913 = vpop.f32.mrb[0].mxu0
      %v914 = vadd.f32 0.0, %v913
      %v915 = vpop.f32.mrb[0].mxu0
      %v916 = vadd.f32 0.0, %v915
      %v917 = vpop.f32.mrb[0].mxu0
      %v918 = vadd.f32 0.0, %v917
      %v919 = vpop.f32.mrb[0].mxu0
      %v920 = vadd.f32 0.0, %v919
      %921 = vmatprep.mubr.bf16.mxu0 %v407
      %922 = vmatmul.mubr.bf16.gmra.mrb[0].mxu0 %v406
      %v923 = vpop.f32.mrb[0].mxu0
      %v924 = vadd.f32 0.0, %v923
      %v925 = vpop.f32.mrb[0].mxu0
      %v926 = vadd.f32 0.0, %v925
      %v927 = vpop.f32.mrb[0].mxu0
      %v928 = vadd.f32 0.0, %v927
      %v929 = vpop.f32.mrb[0].mxu0
      %v930 = vadd.f32 0.0, %v929
      %931 = vdwg.mxu0
      %vm932 = vcmp.eq.s32.totalorder %v399, 0
      %vm933 = vcmp.eq.s32.totalorder %v400, 0
      %vm934 = vcmp.eq.s32.totalorder %v401, 0
      %vm935 = vcmp.eq.s32.totalorder %v402, 0
      %v936 = vrot.slane %v635, 7
      %v937 = vrot.slane %v637, 7
      %v938 = vrot.slane %v639, 7
      %v939 = vrot.slane %v641, 7
      %v940 = vrot.slane %v645, 7
      %v941 = vrot.slane %v647, 7
      %v942 = vrot.slane %v649, 7
      %v943 = vrot.slane %v651, 7
      %vm944 = vcmp.lt.s32.totalorder %v351, 1
      %v945 = vsel %vm944, %v940, %v942
      %v946 = vsel %vm944, %v941, %v943
      %v947 = vsel %vm944, %v938, %v940
      %v948 = vsel %vm944, %v939, %v941
      %v949 = vsel %vm944, %v936, %v938
      %v950 = vsel %vm944, %v937, %v939
      %v951 = vsel %vm944, %v942, %v936
      %v952 = vsel %vm944, %v943, %v937
      %v953 = vsel %vm932, 0.0, %v951
      %v954 = vsel %vm932, 0.0, %v952
      %v955 = vsel %vm933, 0.0, %v949
      %v956 = vsel %vm933, 0.0, %v950
      %v957 = vsel %vm934, 0.0, %v947
      %v958 = vsel %vm934, 0.0, %v948
      %v959 = vsel %vm935, 0.0, %v945
      %v960 = vsel %vm935, 0.0, %v946
      %vm961 = vcmp.eq.s32.totalorder %v399, 15
      %vm962 = vcmp.eq.s32.totalorder %v400, 15
      %vm963 = vcmp.eq.s32.totalorder %v401, 15
      %vm964 = vcmp.eq.s32.totalorder %v402, 15
      %v965 = vrot.slane %v914, 1
      %v966 = vrot.slane %v916, 1
      %v967 = vrot.slane %v918, 1
      %v968 = vrot.slane %v920, 1
      %v969 = vrot.slane %v924, 1
      %v970 = vrot.slane %v926, 1
      %v971 = vrot.slane %v928, 1
      %v972 = vrot.slane %v930, 1
      %vm973 = vcmp.lt.s32.totalorder %v351, 7
      %v974 = vsel %vm973, %v969, %v971
      %v975 = vsel %vm973, %v970, %v972
      %v976 = vsel %vm973, %v967, %v969
      %v977 = vsel %vm973, %v968, %v970
      %v978 = vsel %vm973, %v965, %v967
      %v979 = vsel %vm973, %v966, %v968
      %v980 = vsel %vm973, %v971, %v965
      %v981 = vsel %vm973, %v972, %v966
      %v982 = vsel %vm961, 0.0, %v978
      %v983 = vsel %vm961, 0.0, %v979
      %v984 = vsel %vm962, 0.0, %v976
      %v985 = vsel %vm962, 0.0, %v977
      %v986 = vsel %vm963, 0.0, %v974
      %v987 = vsel %vm963, 0.0, %v975
      %v988 = vsel %vm964, 0.0, %v980
      %v989 = vsel %vm964, 0.0, %v981
      %v1022 = vunpack.c.l.b16 %v654
      %v1023 = vunpack.c.h.b16 %v654
      %v1024 = vunpack.c.l.b16 %v655
      %v1025 = vunpack.c.h.b16 %v655
      %v1026 = vunpack.c.l.b16 %v656
      %v1027 = vunpack.c.h.b16 %v656
      %v1028 = vunpack.c.l.b16 %v657
      %v1029 = vunpack.c.h.b16 %v657
      %v1030 = vunpack.c.l.b16 %v658
      %v1031 = vunpack.c.h.b16 %v658
      %v1032 = vunpack.c.l.b16 %v659
      %v1033 = vunpack.c.h.b16 %v659
      %v1034 = vunpack.c.l.b16 %v660
      %v1035 = vunpack.c.h.b16 %v660
      %v1036 = vunpack.c.l.b16 %v661
      %v1037 = vunpack.c.h.b16 %v661
      %v1038 = vunpack.c.l.b16 %v662
      %v1039 = vunpack.c.h.b16 %v662
      %v1040 = vunpack.c.l.b16 %v663
      %v1041 = vunpack.c.h.b16 %v663
      %v1042 = vunpack.c.l.b16 %v664
      %v1043 = vunpack.c.h.b16 %v664
      %v1044 = vunpack.c.l.b16 %v665
      %v1045 = vunpack.c.h.b16 %v665
      %v1046 = vunpack.c.l.b16 %v666
      %v1047 = vunpack.c.h.b16 %v666
      %v1048 = vunpack.c.l.b16 %v667
      %v1049 = vunpack.c.h.b16 %v667
      %v1050 = vunpack.c.l.b16 %v668
      %v1051 = vunpack.c.h.b16 %v668
      %v1052 = vunpack.c.l.b16 %v669
      %v1053 = vunpack.c.h.b16 %v669
      %v1054 = vunpack.c.l.b16 %v670
      %v1055 = vunpack.c.h.b16 %v670
      %v1056 = vunpack.c.l.b16 %v671
      %v1057 = vunpack.c.h.b16 %v671
      %v1058 = vunpack.c.l.b16 %v672
      %v1059 = vunpack.c.h.b16 %v672
      %v1060 = vunpack.c.l.b16 %v673
      %v1061 = vunpack.c.h.b16 %v673
      %v1062 = vunpack.c.l.b16 %v674
      %v1063 = vunpack.c.h.b16 %v674
      %v1064 = vunpack.c.l.b16 %v675
      %v1065 = vunpack.c.h.b16 %v675
      %v1066 = vunpack.c.l.b16 %v676
      %v1067 = vunpack.c.h.b16 %v676
      %v1068 = vunpack.c.l.b16 %v677
      %v1069 = vunpack.c.h.b16 %v677
      %v1070 = vunpack.c.l.b16 %v678
      %v1071 = vunpack.c.h.b16 %v678
      %v1072 = vunpack.c.l.b16 %v679
      %v1073 = vunpack.c.h.b16 %v679
      %v1074 = vunpack.c.l.b16 %v680
      %v1075 = vunpack.c.h.b16 %v680
      %v1076 = vunpack.c.l.b16 %v681
      %v1077 = vunpack.c.h.b16 %v681
      %v1078 = vunpack.c.l.b16 %v682
      %v1079 = vunpack.c.h.b16 %v682
      %v1080 = vunpack.c.l.b16 %v683
      %v1081 = vunpack.c.h.b16 %v683
      %v1082 = vunpack.c.l.b16 %v684
      %v1083 = vunpack.c.h.b16 %v684
      %v1084 = vunpack.c.l.b16 %v685
      %v1085 = vunpack.c.h.b16 %v685
      %v1086 = vpack.c.b16 %v1024, %v1022
      %v1087 = vpack.c.b16 %v1025, %v1023
      %v1088 = vpack.c.b16 %v1028, %v1026
      %v1089 = vpack.c.b16 %v1029, %v1027
      %v1090 = vpack.c.b16 %v1032, %v1030
      %v1091 = vpack.c.b16 %v1033, %v1031
      %v1092 = vpack.c.b16 %v1036, %v1034
      %v1093 = vpack.c.b16 %v1037, %v1035
      %v1094 = vpack.c.b16 %v1040, %v1038
      %v1095 = vpack.c.b16 %v1041, %v1039
      %v1096 = vpack.c.b16 %v1044, %v1042
      %v1097 = vpack.c.b16 %v1045, %v1043
      %v1098 = vpack.c.b16 %v1048, %v1046
      %v1099 = vpack.c.b16 %v1049, %v1047
      %v1100 = vpack.c.b16 %v1052, %v1050
      %v1101 = vpack.c.b16 %v1053, %v1051
      %v1102 = vpack.c.b16 %v1056, %v1054
      %v1103 = vpack.c.b16 %v1057, %v1055
      %v1104 = vpack.c.b16 %v1060, %v1058
      %v1105 = vpack.c.b16 %v1061, %v1059
      %v1106 = vpack.c.b16 %v1064, %v1062
      %v1107 = vpack.c.b16 %v1065, %v1063
      %v1108 = vpack.c.b16 %v1068, %v1066
      %v1109 = vpack.c.b16 %v1069, %v1067
      %v1110 = vpack.c.b16 %v1072, %v1070
      %v1111 = vpack.c.b16 %v1073, %v1071
      %v1112 = vpack.c.b16 %v1076, %v1074
      %v1113 = vpack.c.b16 %v1077, %v1075
      %v1114 = vpack.c.b16 %v1080, %v1078
      %v1115 = vpack.c.b16 %v1081, %v1079
      %v1116 = vpack.c.b16 %v1084, %v1082
      %v1117 = vpack.c.b16 %v1085, %v1083
      %1150 = vmatprep.subr.bf16.mxu0 %v1087
      %1151 = vmatpush1.bf16.msra.mxu0 %v1086
      %1152 = vmatprep.subr.bf16.mxu0 %v1089
      %1153 = vmatpush1.bf16.msra.mxu0 %v1088
      %1154 = vmatprep.subr.bf16.mxu0 %v1091
      %1155 = vmatpush1.bf16.msra.mxu0 %v1090
      %1156 = vmatprep.subr.bf16.mxu0 %v1093
      %1157 = vmatpush1.bf16.msra.mxu0 %v1092
      %1158 = vmatprep.subr.bf16.mxu0 %v1095
      %1159 = vmatpush1.bf16.msra.mxu0 %v1094
      %1160 = vmatprep.subr.bf16.mxu0 %v1097
      %1161 = vmatpush1.bf16.msra.mxu0 %v1096
      %1162 = vmatprep.subr.bf16.mxu0 %v1099
      %1163 = vmatpush1.bf16.msra.mxu0 %v1098
      %1164 = vmatprep.subr.bf16.mxu0 %v1101
      %1165 = vmatpush1.bf16.msra.mxu0 %v1100
      %1166 = vmatprep.subr.bf16.mxu0 %v1103
      %1167 = vmatpush1.bf16.msra.mxu0 %v1102
      %1168 = vmatprep.subr.bf16.mxu0 %v1105
      %1169 = vmatpush1.bf16.msra.mxu0 %v1104
      %1170 = vmatprep.subr.bf16.mxu0 %v1107
      %1171 = vmatpush1.bf16.msra.mxu0 %v1106
      %1172 = vmatprep.subr.bf16.mxu0 %v1109
      %1173 = vmatpush1.bf16.msra.mxu0 %v1108
      %1174 = vmatprep.subr.bf16.mxu0 %v1111
      %1175 = vmatpush1.bf16.msra.mxu0 %v1110
      %1176 = vmatprep.subr.bf16.mxu0 %v1113
      %1177 = vmatpush1.bf16.msra.mxu0 %v1112
      %1178 = vmatprep.subr.bf16.mxu0 %v1115
      %1179 = vmatpush1.bf16.msra.mxu0 %v1114
      %1180 = vmatprep.subr.bf16.mxu0 %v1117
      %1181 = vmatpush1.bf16.msra.mxu0 %v1116
      %1182 = vmatprep.mubr.bf16.mxu0 %v405
      %1183 = vmatmul.mubr.bf16.gmra.mrb[0].mxu0 %v404
      %v1184 = vpop.f32.mrb[0].mxu0
      %v1185 = vadd.f32 %v953, %v1184
      %v1186 = vpop.f32.mrb[0].mxu0
      %v1187 = vadd.f32 %v954, %v1186
      %v1188 = vpop.f32.mrb[0].mxu0
      %v1189 = vadd.f32 %v955, %v1188
      %v1190 = vpop.f32.mrb[0].mxu0
      %v1191 = vadd.f32 %v956, %v1190
      %1192 = vmatprep.mubr.bf16.mxu0 %v407
      %1193 = vmatmul.mubr.bf16.gmra.mrb[0].mxu0 %v406
      %v1194 = vpop.f32.mrb[0].mxu0
      %v1195 = vadd.f32 %v957, %v1194
      %v1196 = vpop.f32.mrb[0].mxu0
      %v1197 = vadd.f32 %v958, %v1196
      %v1198 = vpop.f32.mrb[0].mxu0
      %v1199 = vadd.f32 %v959, %v1198
      %v1200 = vpop.f32.mrb[0].mxu0
      %v1201 = vadd.f32 %v960, %v1200
      %1202 = vdwg.mxu0
      %v1203 = vadd.f32 %v1185, %v982
      %v1204 = vadd.f32 %v1187, %v983
      %v1205 = vadd.f32 %v1189, %v984
      %v1206 = vadd.f32 %v1191, %v985
      %v1207 = vadd.f32 %v1195, %v986
      %v1208 = vadd.f32 %v1197, %v987
      %v1209 = vadd.f32 %v1199, %v988
      %v1210 = vadd.f32 %v1201, %v989
      %v1212 = vlaneseq
      %v1213 = vshrl.u32 %v1212, 7
      %v1214 = vsub.s32 0, %v1213
      %v1215 = vrot.slane %v403, %v1214
      %v1216 = vlaneseq
      %v1217 = vshrl.u32 %v1216, 7
      %v1218 = vsub.s32 1, %v1217
      %v1219 = vrot.slane %v403, %v1218
      %v1222 = vadd.f32 %v1203, %v1215
      %v1223 = vadd.f32 %v1204, %v1219
      %v1224 = vadd.f32 %v1205, %v1215
      %v1225 = vadd.f32 %v1206, %v1219
      %v1226 = vadd.f32 %v1207, %v1215
      %v1227 = vadd.f32 %v1208, %v1219
      %v1228 = vadd.f32 %v1209, %v1215
      %v1229 = vadd.f32 %v1210, %v1219
      %v1230 = vmax.f32 %v1222, 0.0
      %v1231 = vmax.f32 %v1223, 0.0
      %v1232 = vmax.f32 %v1224, 0.0
      %v1233 = vmax.f32 %v1225, 0.0
      %v1234 = vmax.f32 %v1226, 0.0
      %v1235 = vmax.f32 %v1227, 0.0
      %v1236 = vmax.f32 %v1228, 0.0
      %v1237 = vmax.f32 %v1229, 0.0
      %v1238 = vld [vmem:[%s4] sm:$0x3]
      %v1239 = vpack.c.bf16 %v1232, %v1230
      %v1240 = vpack.c.bf16 %v1233, %v1231
      %v1241 = vpack.c.bf16 %v1236, %v1234
      %v1242 = vpack.c.bf16 %v1237, %v1235
      %v1243 = vld [vmem:[%s3] sm:$0xff]
      %v1244 = vld [vmem:[%s3 + $0x8] sm:$0xff]
      %v1245 = vld [vmem:[%s3 + $0x10] sm:$0xff]
      %v1246 = vld [vmem:[%s3 + $0x18] sm:$0xff]
      %v1247 = vld [vmem:[%s3 + $0x20] sm:$0xff]
      %v1248 = vld [vmem:[%s3 + $0x28] sm:$0xff]
      %v1249 = vld [vmem:[%s3 + $0x30] sm:$0xff]
      %v1250 = vld [vmem:[%s3 + $0x38] sm:$0xff]
      %v1251 = vld [vmem:[%s3 + $0x40] sm:$0xff]
      %v1252 = vld [vmem:[%s3 + $0x48] sm:$0xff]
      %v1253 = vld [vmem:[%s3 + $0x50] sm:$0xff]
      %v1254 = vld [vmem:[%s3 + $0x58] sm:$0xff]
      %v1255 = vld [vmem:[%s3 + $0x60] sm:$0xff]
      %v1256 = vld [vmem:[%s3 + $0x68] sm:$0xff]
      %v1257 = vld [vmem:[%s3 + $0x70] sm:$0xff]
      %v1258 = vld [vmem:[%s3 + $0x78] sm:$0xff]
      %v1259 = vld [vmem:[%s3 + $0x80] sm:$0xff]
      %v1260 = vld [vmem:[%s3 + $0x88] sm:$0xff]
      %v1261 = vld [vmem:[%s3 + $0x90] sm:$0xff]
      %v1262 = vld [vmem:[%s3 + $0x98] sm:$0xff]
      %v1263 = vld [vmem:[%s3 + $0xa0] sm:$0xff]
      %v1264 = vld [vmem:[%s3 + $0xa8] sm:$0xff]
      %v1265 = vld [vmem:[%s3 + $0xb0] sm:$0xff]
      %v1266 = vld [vmem:[%s3 + $0xb8] sm:$0xff]
      %v1267 = vld [vmem:[%s3 + $0xc0] sm:$0xff]
      %v1268 = vld [vmem:[%s3 + $0xc8] sm:$0xff]
      %v1269 = vld [vmem:[%s3 + $0xd0] sm:$0xff]
      %v1270 = vld [vmem:[%s3 + $0xd8] sm:$0xff]
      %v1271 = vld [vmem:[%s3 + $0xe0] sm:$0xff]
      %v1272 = vld [vmem:[%s3 + $0xe8] sm:$0xff]
      %v1273 = vld [vmem:[%s3 + $0xf0] sm:$0xff]
      %v1274 = vld [vmem:[%s3 + $0xf8] sm:$0xff]
      %v1307 = vunpack.c.l.b16 %v1243
      %v1308 = vunpack.c.h.b16 %v1243
      %v1309 = vunpack.c.l.b16 %v1244
      %v1310 = vunpack.c.h.b16 %v1244
      %v1311 = vunpack.c.l.b16 %v1245
      %v1312 = vunpack.c.h.b16 %v1245
      %v1313 = vunpack.c.l.b16 %v1246
      %v1314 = vunpack.c.h.b16 %v1246
      %v1315 = vunpack.c.l.b16 %v1247
      %v1316 = vunpack.c.h.b16 %v1247
      %v1317 = vunpack.c.l.b16 %v1248
      %v1318 = vunpack.c.h.b16 %v1248
      %v1319 = vunpack.c.l.b16 %v1249
      %v1320 = vunpack.c.h.b16 %v1249
      %v1321 = vunpack.c.l.b16 %v1250
      %v1322 = vunpack.c.h.b16 %v1250
      %v1323 = vunpack.c.l.b16 %v1251
      %v1324 = vunpack.c.h.b16 %v1251
      %v1325 = vunpack.c.l.b16 %v1252
      %v1326 = vunpack.c.h.b16 %v1252
      %v1327 = vunpack.c.l.b16 %v1253
      %v1328 = vunpack.c.h.b16 %v1253
      %v1329 = vunpack.c.l.b16 %v1254
      %v1330 = vunpack.c.h.b16 %v1254
      %v1331 = vunpack.c.l.b16 %v1255
      %v1332 = vunpack.c.h.b16 %v1255
      %v1333 = vunpack.c.l.b16 %v1256
      %v1334 = vunpack.c.h.b16 %v1256
      %v1335 = vunpack.c.l.b16 %v1257
      %v1336 = vunpack.c.h.b16 %v1257
      %v1337 = vunpack.c.l.b16 %v1258
      %v1338 = vunpack.c.h.b16 %v1258
      %v1339 = vunpack.c.l.b16 %v1259
      %v1340 = vunpack.c.h.b16 %v1259
      %v1341 = vunpack.c.l.b16 %v1260
      %v1342 = vunpack.c.h.b16 %v1260
      %v1343 = vunpack.c.l.b16 %v1261
      %v1344 = vunpack.c.h.b16 %v1261
      %v1345 = vunpack.c.l.b16 %v1262
      %v1346 = vunpack.c.h.b16 %v1262
      %v1347 = vunpack.c.l.b16 %v1263
      %v1348 = vunpack.c.h.b16 %v1263
      %v1349 = vunpack.c.l.b16 %v1264
      %v1350 = vunpack.c.h.b16 %v1264
      %v1351 = vunpack.c.l.b16 %v1265
      %v1352 = vunpack.c.h.b16 %v1265
      %v1353 = vunpack.c.l.b16 %v1266
      %v1354 = vunpack.c.h.b16 %v1266
      %v1355 = vunpack.c.l.b16 %v1267
      %v1356 = vunpack.c.h.b16 %v1267
      %v1357 = vunpack.c.l.b16 %v1268
      %v1358 = vunpack.c.h.b16 %v1268
      %v1359 = vunpack.c.l.b16 %v1269
      %v1360 = vunpack.c.h.b16 %v1269
      %v1361 = vunpack.c.l.b16 %v1270
      %v1362 = vunpack.c.h.b16 %v1270
      %v1363 = vunpack.c.l.b16 %v1271
      %v1364 = vunpack.c.h.b16 %v1271
      %v1365 = vunpack.c.l.b16 %v1272
      %v1366 = vunpack.c.h.b16 %v1272
      %v1367 = vunpack.c.l.b16 %v1273
      %v1368 = vunpack.c.h.b16 %v1273
      %v1369 = vunpack.c.l.b16 %v1274
      %v1370 = vunpack.c.h.b16 %v1274
      %v1371 = vpack.c.b16 %v1309, %v1307
      %v1372 = vpack.c.b16 %v1310, %v1308
      %v1373 = vpack.c.b16 %v1313, %v1311
      %v1374 = vpack.c.b16 %v1314, %v1312
      %v1375 = vpack.c.b16 %v1317, %v1315
      %v1376 = vpack.c.b16 %v1318, %v1316
      %v1377 = vpack.c.b16 %v1321, %v1319
      %v1378 = vpack.c.b16 %v1322, %v1320
      %v1379 = vpack.c.b16 %v1325, %v1323
      %v1380 = vpack.c.b16 %v1326, %v1324
      %v1381 = vpack.c.b16 %v1329, %v1327
      %v1382 = vpack.c.b16 %v1330, %v1328
      %v1383 = vpack.c.b16 %v1333, %v1331
      %v1384 = vpack.c.b16 %v1334, %v1332
      %v1385 = vpack.c.b16 %v1337, %v1335
      %v1386 = vpack.c.b16 %v1338, %v1336
      %v1387 = vpack.c.b16 %v1341, %v1339
      %v1388 = vpack.c.b16 %v1342, %v1340
      %v1389 = vpack.c.b16 %v1345, %v1343
      %v1390 = vpack.c.b16 %v1346, %v1344
      %v1391 = vpack.c.b16 %v1349, %v1347
      %v1392 = vpack.c.b16 %v1350, %v1348
      %v1393 = vpack.c.b16 %v1353, %v1351
      %v1394 = vpack.c.b16 %v1354, %v1352
      %v1395 = vpack.c.b16 %v1357, %v1355
      %v1396 = vpack.c.b16 %v1358, %v1356
      %v1397 = vpack.c.b16 %v1361, %v1359
      %v1398 = vpack.c.b16 %v1362, %v1360
      %v1399 = vpack.c.b16 %v1365, %v1363
      %v1400 = vpack.c.b16 %v1366, %v1364
      %v1401 = vpack.c.b16 %v1369, %v1367
      %v1402 = vpack.c.b16 %v1370, %v1368
      %1435 = vmatprep.subr.bf16.mxu0 %v1372
      %1436 = vmatpush1.bf16.msra.mxu0 %v1371
      %1437 = vmatprep.subr.bf16.mxu0 %v1374
      %1438 = vmatpush1.bf16.msra.mxu0 %v1373
      %1439 = vmatprep.subr.bf16.mxu0 %v1376
      %1440 = vmatpush1.bf16.msra.mxu0 %v1375
      %1441 = vmatprep.subr.bf16.mxu0 %v1378
      %1442 = vmatpush1.bf16.msra.mxu0 %v1377
      %1443 = vmatprep.subr.bf16.mxu0 %v1380
      %1444 = vmatpush1.bf16.msra.mxu0 %v1379
      %1445 = vmatprep.subr.bf16.mxu0 %v1382
      %1446 = vmatpush1.bf16.msra.mxu0 %v1381
      %1447 = vmatprep.subr.bf16.mxu0 %v1384
      %1448 = vmatpush1.bf16.msra.mxu0 %v1383
      %1449 = vmatprep.subr.bf16.mxu0 %v1386
      %1450 = vmatpush1.bf16.msra.mxu0 %v1385
      %1451 = vmatprep.subr.bf16.mxu0 %v1388
      %1452 = vmatpush1.bf16.msra.mxu0 %v1387
      %1453 = vmatprep.subr.bf16.mxu0 %v1390
      %1454 = vmatpush1.bf16.msra.mxu0 %v1389
      %1455 = vmatprep.subr.bf16.mxu0 %v1392
      %1456 = vmatpush1.bf16.msra.mxu0 %v1391
      %1457 = vmatprep.subr.bf16.mxu0 %v1394
      %1458 = vmatpush1.bf16.msra.mxu0 %v1393
      %1459 = vmatprep.subr.bf16.mxu0 %v1396
      %1460 = vmatpush1.bf16.msra.mxu0 %v1395
      %1461 = vmatprep.subr.bf16.mxu0 %v1398
      %1462 = vmatpush1.bf16.msra.mxu0 %v1397
      %1463 = vmatprep.subr.bf16.mxu0 %v1400
      %1464 = vmatpush1.bf16.msra.mxu0 %v1399
      %1465 = vmatprep.subr.bf16.mxu0 %v1402
      %1466 = vmatpush1.bf16.msra.mxu0 %v1401
      %1467 = vmatprep.mubr.bf16.mxu0 %v1240
      %1468 = vmatmul.mubr.bf16.gmra.mrb[0].mxu0 %v1239
      %v1469 = vpop.f32.mrb[0].mxu0
      %v1470 = vadd.f32 0.0, %v1469
      %v1471 = vpop.f32.mrb[0].mxu0
      %v1472 = vadd.f32 0.0, %v1471
      %v1473 = vpop.f32.mrb[0].mxu0
      %v1474 = vadd.f32 0.0, %v1473
      %v1475 = vpop.f32.mrb[0].mxu0
      %v1476 = vadd.f32 0.0, %v1475
      %1477 = vmatprep.mubr.bf16.mxu0 %v1242
      %1478 = vmatmul.mubr.bf16.gmra.mrb[0].mxu0 %v1241
      %v1479 = vpop.f32.mrb[0].mxu0
      %v1480 = vadd.f32 0.0, %v1479
      %v1481 = vpop.f32.mrb[0].mxu0
      %v1482 = vadd.f32 0.0, %v1481
      %v1483 = vpop.f32.mrb[0].mxu0
      %v1484 = vadd.f32 0.0, %v1483
      %v1485 = vpop.f32.mrb[0].mxu0
      %v1486 = vadd.f32 0.0, %v1485
      %1487 = vdwg.mxu0
      %s1488 = scalar_lea.vmem %s3, 256
      %v1489 = vld [vmem:[%s1488] sm:$0xff]
      %v1490 = vld [vmem:[%s1488 + $0x8] sm:$0xff]
      %v1491 = vld [vmem:[%s1488 + $0x10] sm:$0xff]
      %v1492 = vld [vmem:[%s1488 + $0x18] sm:$0xff]
      %v1493 = vld [vmem:[%s1488 + $0x20] sm:$0xff]
      %v1494 = vld [vmem:[%s1488 + $0x28] sm:$0xff]
      %v1495 = vld [vmem:[%s1488 + $0x30] sm:$0xff]
      %v1496 = vld [vmem:[%s1488 + $0x38] sm:$0xff]
      %v1497 = vld [vmem:[%s1488 + $0x40] sm:$0xff]
      %v1498 = vld [vmem:[%s1488 + $0x48] sm:$0xff]
      %v1499 = vld [vmem:[%s1488 + $0x50] sm:$0xff]
      %v1500 = vld [vmem:[%s1488 + $0x58] sm:$0xff]
      %v1501 = vld [vmem:[%s1488 + $0x60] sm:$0xff]
      %v1502 = vld [vmem:[%s1488 + $0x68] sm:$0xff]
      %v1503 = vld [vmem:[%s1488 + $0x70] sm:$0xff]
      %v1504 = vld [vmem:[%s1488 + $0x78] sm:$0xff]
      %v1505 = vld [vmem:[%s1488 + $0x80] sm:$0xff]
      %v1506 = vld [vmem:[%s1488 + $0x88] sm:$0xff]
      %v1507 = vld [vmem:[%s1488 + $0x90] sm:$0xff]
      %v1508 = vld [vmem:[%s1488 + $0x98] sm:$0xff]
      %v1509 = vld [vmem:[%s1488 + $0xa0] sm:$0xff]
      %v1510 = vld [vmem:[%s1488 + $0xa8] sm:$0xff]
      %v1511 = vld [vmem:[%s1488 + $0xb0] sm:$0xff]
      %v1512 = vld [vmem:[%s1488 + $0xb8] sm:$0xff]
      %v1513 = vld [vmem:[%s1488 + $0xc0] sm:$0xff]
      %v1514 = vld [vmem:[%s1488 + $0xc8] sm:$0xff]
      %v1515 = vld [vmem:[%s1488 + $0xd0] sm:$0xff]
      %v1516 = vld [vmem:[%s1488 + $0xd8] sm:$0xff]
      %v1517 = vld [vmem:[%s1488 + $0xe0] sm:$0xff]
      %v1518 = vld [vmem:[%s1488 + $0xe8] sm:$0xff]
      %v1519 = vld [vmem:[%s1488 + $0xf0] sm:$0xff]
      %v1520 = vld [vmem:[%s1488 + $0xf8] sm:$0xff]
      %s1521 = scalar_lea.vmem %s3, 512
      %v1522 = vld [vmem:[%s1521] sm:$0xff]
      %v1523 = vld [vmem:[%s1521 + $0x8] sm:$0xff]
      %v1524 = vld [vmem:[%s1521 + $0x10] sm:$0xff]
      %v1525 = vld [vmem:[%s1521 + $0x18] sm:$0xff]
      %v1526 = vld [vmem:[%s1521 + $0x20] sm:$0xff]
      %v1527 = vld [vmem:[%s1521 + $0x28] sm:$0xff]
      %v1528 = vld [vmem:[%s1521 + $0x30] sm:$0xff]
      %v1529 = vld [vmem:[%s1521 + $0x38] sm:$0xff]
      %v1530 = vld [vmem:[%s1521 + $0x40] sm:$0xff]
      %v1531 = vld [vmem:[%s1521 + $0x48] sm:$0xff]
      %v1532 = vld [vmem:[%s1521 + $0x50] sm:$0xff]
      %v1533 = vld [vmem:[%s1521 + $0x58] sm:$0xff]
      %v1534 = vld [vmem:[%s1521 + $0x60] sm:$0xff]
      %v1535 = vld [vmem:[%s1521 + $0x68] sm:$0xff]
      %v1536 = vld [vmem:[%s1521 + $0x70] sm:$0xff]
      %v1537 = vld [vmem:[%s1521 + $0x78] sm:$0xff]
      %v1538 = vld [vmem:[%s1521 + $0x80] sm:$0xff]
      %v1539 = vld [vmem:[%s1521 + $0x88] sm:$0xff]
      %v1540 = vld [vmem:[%s1521 + $0x90] sm:$0xff]
      %v1541 = vld [vmem:[%s1521 + $0x98] sm:$0xff]
      %v1542 = vld [vmem:[%s1521 + $0xa0] sm:$0xff]
      %v1543 = vld [vmem:[%s1521 + $0xa8] sm:$0xff]
      %v1544 = vld [vmem:[%s1521 + $0xb0] sm:$0xff]
      %v1545 = vld [vmem:[%s1521 + $0xb8] sm:$0xff]
      %v1546 = vld [vmem:[%s1521 + $0xc0] sm:$0xff]
      %v1547 = vld [vmem:[%s1521 + $0xc8] sm:$0xff]
      %v1548 = vld [vmem:[%s1521 + $0xd0] sm:$0xff]
      %v1549 = vld [vmem:[%s1521 + $0xd8] sm:$0xff]
      %v1550 = vld [vmem:[%s1521 + $0xe0] sm:$0xff]
      %v1551 = vld [vmem:[%s1521 + $0xe8] sm:$0xff]
      %v1552 = vld [vmem:[%s1521 + $0xf0] sm:$0xff]
      %v1553 = vld [vmem:[%s1521 + $0xf8] sm:$0xff]
      %v1586 = vunpack.c.l.b16 %v1522
      %v1587 = vunpack.c.h.b16 %v1522
      %v1588 = vunpack.c.l.b16 %v1523
      %v1589 = vunpack.c.h.b16 %v1523
      %v1590 = vunpack.c.l.b16 %v1524
      %v1591 = vunpack.c.h.b16 %v1524
      %v1592 = vunpack.c.l.b16 %v1525
      %v1593 = vunpack.c.h.b16 %v1525
      %v1594 = vunpack.c.l.b16 %v1526
      %v1595 = vunpack.c.h.b16 %v1526
      %v1596 = vunpack.c.l.b16 %v1527
      %v1597 = vunpack.c.h.b16 %v1527
      %v1598 = vunpack.c.l.b16 %v1528
      %v1599 = vunpack.c.h.b16 %v1528
      %v1600 = vunpack.c.l.b16 %v1529
      %v1601 = vunpack.c.h.b16 %v1529
      %v1602 = vunpack.c.l.b16 %v1530
      %v1603 = vunpack.c.h.b16 %v1530
      %v1604 = vunpack.c.l.b16 %v1531
      %v1605 = vunpack.c.h.b16 %v1531
      %v1606 = vunpack.c.l.b16 %v1532
      %v1607 = vunpack.c.h.b16 %v1532
      %v1608 = vunpack.c.l.b16 %v1533
      %v1609 = vunpack.c.h.b16 %v1533
      %v1610 = vunpack.c.l.b16 %v1534
      %v1611 = vunpack.c.h.b16 %v1534
      %v1612 = vunpack.c.l.b16 %v1535
      %v1613 = vunpack.c.h.b16 %v1535
      %v1614 = vunpack.c.l.b16 %v1536
      %v1615 = vunpack.c.h.b16 %v1536
      %v1616 = vunpack.c.l.b16 %v1537
      %v1617 = vunpack.c.h.b16 %v1537
      %v1618 = vunpack.c.l.b16 %v1538
      %v1619 = vunpack.c.h.b16 %v1538
      %v1620 = vunpack.c.l.b16 %v1539
      %v1621 = vunpack.c.h.b16 %v1539
      %v1622 = vunpack.c.l.b16 %v1540
      %v1623 = vunpack.c.h.b16 %v1540
      %v1624 = vunpack.c.l.b16 %v1541
      %v1625 = vunpack.c.h.b16 %v1541
      %v1626 = vunpack.c.l.b16 %v1542
      %v1627 = vunpack.c.h.b16 %v1542
      %v1628 = vunpack.c.l.b16 %v1543
      %v1629 = vunpack.c.h.b16 %v1543
      %v1630 = vunpack.c.l.b16 %v1544
      %v1631 = vunpack.c.h.b16 %v1544
      %v1632 = vunpack.c.l.b16 %v1545
      %v1633 = vunpack.c.h.b16 %v1545
      %v1634 = vunpack.c.l.b16 %v1546
      %v1635 = vunpack.c.h.b16 %v1546
      %v1636 = vunpack.c.l.b16 %v1547
      %v1637 = vunpack.c.h.b16 %v1547
      %v1638 = vunpack.c.l.b16 %v1548
      %v1639 = vunpack.c.h.b16 %v1548
      %v1640 = vunpack.c.l.b16 %v1549
      %v1641 = vunpack.c.h.b16 %v1549
      %v1642 = vunpack.c.l.b16 %v1550
      %v1643 = vunpack.c.h.b16 %v1550
      %v1644 = vunpack.c.l.b16 %v1551
      %v1645 = vunpack.c.h.b16 %v1551
      %v1646 = vunpack.c.l.b16 %v1552
      %v1647 = vunpack.c.h.b16 %v1552
      %v1648 = vunpack.c.l.b16 %v1553
      %v1649 = vunpack.c.h.b16 %v1553
      %v1650 = vpack.c.b16 %v1588, %v1586
      %v1651 = vpack.c.b16 %v1589, %v1587
      %v1652 = vpack.c.b16 %v1592, %v1590
      %v1653 = vpack.c.b16 %v1593, %v1591
      %v1654 = vpack.c.b16 %v1596, %v1594
      %v1655 = vpack.c.b16 %v1597, %v1595
      %v1656 = vpack.c.b16 %v1600, %v1598
      %v1657 = vpack.c.b16 %v1601, %v1599
      %v1658 = vpack.c.b16 %v1604, %v1602
      %v1659 = vpack.c.b16 %v1605, %v1603
      %v1660 = vpack.c.b16 %v1608, %v1606
      %v1661 = vpack.c.b16 %v1609, %v1607
      %v1662 = vpack.c.b16 %v1612, %v1610
      %v1663 = vpack.c.b16 %v1613, %v1611
      %v1664 = vpack.c.b16 %v1616, %v1614
      %v1665 = vpack.c.b16 %v1617, %v1615
      %v1666 = vpack.c.b16 %v1620, %v1618
      %v1667 = vpack.c.b16 %v1621, %v1619
      %v1668 = vpack.c.b16 %v1624, %v1622
      %v1669 = vpack.c.b16 %v1625, %v1623
      %v1670 = vpack.c.b16 %v1628, %v1626
      %v1671 = vpack.c.b16 %v1629, %v1627
      %v1672 = vpack.c.b16 %v1632, %v1630
      %v1673 = vpack.c.b16 %v1633, %v1631
      %v1674 = vpack.c.b16 %v1636, %v1634
      %v1675 = vpack.c.b16 %v1637, %v1635
      %v1676 = vpack.c.b16 %v1640, %v1638
      %v1677 = vpack.c.b16 %v1641, %v1639
      %v1678 = vpack.c.b16 %v1644, %v1642
      %v1679 = vpack.c.b16 %v1645, %v1643
      %v1680 = vpack.c.b16 %v1648, %v1646
      %v1681 = vpack.c.b16 %v1649, %v1647
      %1714 = vmatprep.subr.bf16.mxu0 %v1651
      %1715 = vmatpush1.bf16.msra.mxu0 %v1650
      %1716 = vmatprep.subr.bf16.mxu0 %v1653
      %1717 = vmatpush1.bf16.msra.mxu0 %v1652
      %1718 = vmatprep.subr.bf16.mxu0 %v1655
      %1719 = vmatpush1.bf16.msra.mxu0 %v1654
      %1720 = vmatprep.subr.bf16.mxu0 %v1657
      %1721 = vmatpush1.bf16.msra.mxu0 %v1656
      %1722 = vmatprep.subr.bf16.mxu0 %v1659
      %1723 = vmatpush1.bf16.msra.mxu0 %v1658
      %1724 = vmatprep.subr.bf16.mxu0 %v1661
      %1725 = vmatpush1.bf16.msra.mxu0 %v1660
      %1726 = vmatprep.subr.bf16.mxu0 %v1663
      %1727 = vmatpush1.bf16.msra.mxu0 %v1662
      %1728 = vmatprep.subr.bf16.mxu0 %v1665
      %1729 = vmatpush1.bf16.msra.mxu0 %v1664
      %1730 = vmatprep.subr.bf16.mxu0 %v1667
      %1731 = vmatpush1.bf16.msra.mxu0 %v1666
      %1732 = vmatprep.subr.bf16.mxu0 %v1669
      %1733 = vmatpush1.bf16.msra.mxu0 %v1668
      %1734 = vmatprep.subr.bf16.mxu0 %v1671
      %1735 = vmatpush1.bf16.msra.mxu0 %v1670
      %1736 = vmatprep.subr.bf16.mxu0 %v1673
      %1737 = vmatpush1.bf16.msra.mxu0 %v1672
      %1738 = vmatprep.subr.bf16.mxu0 %v1675
      %1739 = vmatpush1.bf16.msra.mxu0 %v1674
      %1740 = vmatprep.subr.bf16.mxu0 %v1677
      %1741 = vmatpush1.bf16.msra.mxu0 %v1676
      %1742 = vmatprep.subr.bf16.mxu0 %v1679
      %1743 = vmatpush1.bf16.msra.mxu0 %v1678
      %1744 = vmatprep.subr.bf16.mxu0 %v1681
      %1745 = vmatpush1.bf16.msra.mxu0 %v1680
      %1746 = vmatprep.mubr.bf16.mxu0 %v1240
      %1747 = vmatmul.mubr.bf16.gmra.mrb[0].mxu0 %v1239
      %v1748 = vpop.f32.mrb[0].mxu0
      %v1749 = vadd.f32 0.0, %v1748
      %v1750 = vpop.f32.mrb[0].mxu0
      %v1751 = vadd.f32 0.0, %v1750
      %v1752 = vpop.f32.mrb[0].mxu0
      %v1753 = vadd.f32 0.0, %v1752
      %v1754 = vpop.f32.mrb[0].mxu0
      %v1755 = vadd.f32 0.0, %v1754
      %1756 = vmatprep.mubr.bf16.mxu0 %v1242
      %1757 = vmatmul.mubr.bf16.gmra.mrb[0].mxu0 %v1241
      %v1758 = vpop.f32.mrb[0].mxu0
      %v1759 = vadd.f32 0.0, %v1758
      %v1760 = vpop.f32.mrb[0].mxu0
      %v1761 = vadd.f32 0.0, %v1760
      %v1762 = vpop.f32.mrb[0].mxu0
      %v1763 = vadd.f32 0.0, %v1762
      %v1764 = vpop.f32.mrb[0].mxu0
      %v1765 = vadd.f32 0.0, %v1764
      %1766 = vdwg.mxu0
      %v1767 = vrot.slane %v1470, 7
      %v1768 = vrot.slane %v1472, 7
      %v1769 = vrot.slane %v1474, 7
      %v1770 = vrot.slane %v1476, 7
      %v1771 = vrot.slane %v1480, 7
      %v1772 = vrot.slane %v1482, 7
      %v1773 = vrot.slane %v1484, 7
      %v1774 = vrot.slane %v1486, 7
      %v1775 = vsel %vm944, %v1771, %v1773
      %v1776 = vsel %vm944, %v1772, %v1774
      %v1777 = vsel %vm944, %v1769, %v1771
      %v1778 = vsel %vm944, %v1770, %v1772
      %v1779 = vsel %vm944, %v1767, %v1769
      %v1780 = vsel %vm944, %v1768, %v1770
      %v1781 = vsel %vm944, %v1773, %v1767
      %v1782 = vsel %vm944, %v1774, %v1768
      %v1783 = vsel %vm932, 0.0, %v1781
      %v1784 = vsel %vm932, 0.0, %v1782
      %v1785 = vsel %vm933, 0.0, %v1779
      %v1786 = vsel %vm933, 0.0, %v1780
      %v1787 = vsel %vm934, 0.0, %v1777
      %v1788 = vsel %vm934, 0.0, %v1778
      %v1789 = vsel %vm935, 0.0, %v1775
      %v1790 = vsel %vm935, 0.0, %v1776
      %v1791 = vrot.slane %v1749, 1
      %v1792 = vrot.slane %v1751, 1
      %v1793 = vrot.slane %v1753, 1
      %v1794 = vrot.slane %v1755, 1
      %v1795 = vrot.slane %v1759, 1
      %v1796 = vrot.slane %v1761, 1
      %v1797 = vrot.slane %v1763, 1
      %v1798 = vrot.slane %v1765, 1
      %v1799 = vsel %vm973, %v1795, %v1797
      %v1800 = vsel %vm973, %v1796, %v1798
      %v1801 = vsel %vm973, %v1793, %v1795
      %v1802 = vsel %vm973, %v1794, %v1796
      %v1803 = vsel %vm973, %v1791, %v1793
      %v1804 = vsel %vm973, %v1792, %v1794
      %v1805 = vsel %vm973, %v1797, %v1791
      %v1806 = vsel %vm973, %v1798, %v1792
      %v1807 = vsel %vm961, 0.0, %v1803
      %v1808 = vsel %vm961, 0.0, %v1804
      %v1809 = vsel %vm962, 0.0, %v1801
      %v1810 = vsel %vm962, 0.0, %v1802
      %v1811 = vsel %vm963, 0.0, %v1799
      %v1812 = vsel %vm963, 0.0, %v1800
      %v1813 = vsel %vm964, 0.0, %v1805
      %v1814 = vsel %vm964, 0.0, %v1806
      %v1847 = vunpack.c.l.b16 %v1489
      %v1848 = vunpack.c.h.b16 %v1489
      %v1849 = vunpack.c.l.b16 %v1490
      %v1850 = vunpack.c.h.b16 %v1490
      %v1851 = vunpack.c.l.b16 %v1491
      %v1852 = vunpack.c.h.b16 %v1491
      %v1853 = vunpack.c.l.b16 %v1492
      %v1854 = vunpack.c.h.b16 %v1492
      %v1855 = vunpack.c.l.b16 %v1493
      %v1856 = vunpack.c.h.b16 %v1493
      %v1857 = vunpack.c.l.b16 %v1494
      %v1858 = vunpack.c.h.b16 %v1494
      %v1859 = vunpack.c.l.b16 %v1495
      %v1860 = vunpack.c.h.b16 %v1495
      %v1861 = vunpack.c.l.b16 %v1496
      %v1862 = vunpack.c.h.b16 %v1496
      %v1863 = vunpack.c.l.b16 %v1497
      %v1864 = vunpack.c.h.b16 %v1497
      %v1865 = vunpack.c.l.b16 %v1498
      %v1866 = vunpack.c.h.b16 %v1498
      %v1867 = vunpack.c.l.b16 %v1499
      %v1868 = vunpack.c.h.b16 %v1499
      %v1869 = vunpack.c.l.b16 %v1500
      %v1870 = vunpack.c.h.b16 %v1500
      %v1871 = vunpack.c.l.b16 %v1501
      %v1872 = vunpack.c.h.b16 %v1501
      %v1873 = vunpack.c.l.b16 %v1502
      %v1874 = vunpack.c.h.b16 %v1502
      %v1875 = vunpack.c.l.b16 %v1503
      %v1876 = vunpack.c.h.b16 %v1503
      %v1877 = vunpack.c.l.b16 %v1504
      %v1878 = vunpack.c.h.b16 %v1504
      %v1879 = vunpack.c.l.b16 %v1505
      %v1880 = vunpack.c.h.b16 %v1505
      %v1881 = vunpack.c.l.b16 %v1506
      %v1882 = vunpack.c.h.b16 %v1506
      %v1883 = vunpack.c.l.b16 %v1507
      %v1884 = vunpack.c.h.b16 %v1507
      %v1885 = vunpack.c.l.b16 %v1508
      %v1886 = vunpack.c.h.b16 %v1508
      %v1887 = vunpack.c.l.b16 %v1509
      %v1888 = vunpack.c.h.b16 %v1509
      %v1889 = vunpack.c.l.b16 %v1510
      %v1890 = vunpack.c.h.b16 %v1510
      %v1891 = vunpack.c.l.b16 %v1511
      %v1892 = vunpack.c.h.b16 %v1511
      %v1893 = vunpack.c.l.b16 %v1512
      %v1894 = vunpack.c.h.b16 %v1512
      %v1895 = vunpack.c.l.b16 %v1513
      %v1896 = vunpack.c.h.b16 %v1513
      %v1897 = vunpack.c.l.b16 %v1514
      %v1898 = vunpack.c.h.b16 %v1514
      %v1899 = vunpack.c.l.b16 %v1515
      %v1900 = vunpack.c.h.b16 %v1515
      %v1901 = vunpack.c.l.b16 %v1516
      %v1902 = vunpack.c.h.b16 %v1516
      %v1903 = vunpack.c.l.b16 %v1517
      %v1904 = vunpack.c.h.b16 %v1517
      %v1905 = vunpack.c.l.b16 %v1518
      %v1906 = vunpack.c.h.b16 %v1518
      %v1907 = vunpack.c.l.b16 %v1519
      %v1908 = vunpack.c.h.b16 %v1519
      %v1909 = vunpack.c.l.b16 %v1520
      %v1910 = vunpack.c.h.b16 %v1520
      %v1911 = vpack.c.b16 %v1849, %v1847
      %v1912 = vpack.c.b16 %v1850, %v1848
      %v1913 = vpack.c.b16 %v1853, %v1851
      %v1914 = vpack.c.b16 %v1854, %v1852
      %v1915 = vpack.c.b16 %v1857, %v1855
      %v1916 = vpack.c.b16 %v1858, %v1856
      %v1917 = vpack.c.b16 %v1861, %v1859
      %v1918 = vpack.c.b16 %v1862, %v1860
      %v1919 = vpack.c.b16 %v1865, %v1863
      %v1920 = vpack.c.b16 %v1866, %v1864
      %v1921 = vpack.c.b16 %v1869, %v1867
      %v1922 = vpack.c.b16 %v1870, %v1868
      %v1923 = vpack.c.b16 %v1873, %v1871
      %v1924 = vpack.c.b16 %v1874, %v1872
      %v1925 = vpack.c.b16 %v1877, %v1875
      %v1926 = vpack.c.b16 %v1878, %v1876
      %v1927 = vpack.c.b16 %v1881, %v1879
      %v1928 = vpack.c.b16 %v1882, %v1880
      %v1929 = vpack.c.b16 %v1885, %v1883
      %v1930 = vpack.c.b16 %v1886, %v1884
      %v1931 = vpack.c.b16 %v1889, %v1887
      %v1932 = vpack.c.b16 %v1890, %v1888
      %v1933 = vpack.c.b16 %v1893, %v1891
      %v1934 = vpack.c.b16 %v1894, %v1892
      %v1935 = vpack.c.b16 %v1897, %v1895
      %v1936 = vpack.c.b16 %v1898, %v1896
      %v1937 = vpack.c.b16 %v1901, %v1899
      %v1938 = vpack.c.b16 %v1902, %v1900
      %v1939 = vpack.c.b16 %v1905, %v1903
      %v1940 = vpack.c.b16 %v1906, %v1904
      %v1941 = vpack.c.b16 %v1909, %v1907
      %v1942 = vpack.c.b16 %v1910, %v1908
      %1975 = vmatprep.subr.bf16.mxu0 %v1912
      %1976 = vmatpush1.bf16.msra.mxu0 %v1911
      %1977 = vmatprep.subr.bf16.mxu0 %v1914
      %1978 = vmatpush1.bf16.msra.mxu0 %v1913
      %1979 = vmatprep.subr.bf16.mxu0 %v1916
      %1980 = vmatpush1.bf16.msra.mxu0 %v1915
      %1981 = vmatprep.subr.bf16.mxu0 %v1918
      %1982 = vmatpush1.bf16.msra.mxu0 %v1917
      %1983 = vmatprep.subr.bf16.mxu0 %v1920
      %1984 = vmatpush1.bf16.msra.mxu0 %v1919
      %1985 = vmatprep.subr.bf16.mxu0 %v1922
      %1986 = vmatpush1.bf16.msra.mxu0 %v1921
      %1987 = vmatprep.subr.bf16.mxu0 %v1924
      %1988 = vmatpush1.bf16.msra.mxu0 %v1923
      %1989 = vmatprep.subr.bf16.mxu0 %v1926
      %1990 = vmatpush1.bf16.msra.mxu0 %v1925
      %1991 = vmatprep.subr.bf16.mxu0 %v1928
      %1992 = vmatpush1.bf16.msra.mxu0 %v1927
      %1993 = vmatprep.subr.bf16.mxu0 %v1930
      %1994 = vmatpush1.bf16.msra.mxu0 %v1929
      %1995 = vmatprep.subr.bf16.mxu0 %v1932
      %1996 = vmatpush1.bf16.msra.mxu0 %v1931
      %1997 = vmatprep.subr.bf16.mxu0 %v1934
      %1998 = vmatpush1.bf16.msra.mxu0 %v1933
      %1999 = vmatprep.subr.bf16.mxu0 %v1936
      %2000 = vmatpush1.bf16.msra.mxu0 %v1935
      %2001 = vmatprep.subr.bf16.mxu0 %v1938
      %2002 = vmatpush1.bf16.msra.mxu0 %v1937
      %2003 = vmatprep.subr.bf16.mxu0 %v1940
      %2004 = vmatpush1.bf16.msra.mxu0 %v1939
      %2005 = vmatprep.subr.bf16.mxu0 %v1942
      %2006 = vmatpush1.bf16.msra.mxu0 %v1941
      %2007 = vmatprep.mubr.bf16.mxu0 %v1240
      %2008 = vmatmul.mubr.bf16.gmra.mrb[0].mxu0 %v1239
      %v2009 = vpop.f32.mrb[0].mxu0
      %v2010 = vadd.f32 %v1783, %v2009
      %v2011 = vpop.f32.mrb[0].mxu0
      %v2012 = vadd.f32 %v1784, %v2011
      %v2013 = vpop.f32.mrb[0].mxu0
      %v2014 = vadd.f32 %v1785, %v2013
      %v2015 = vpop.f32.mrb[0].mxu0
      %v2016 = vadd.f32 %v1786, %v2015
      %2017 = vmatprep.mubr.bf16.mxu0 %v1242
      %2018 = vmatmul.mubr.bf16.gmra.mrb[0].mxu0 %v1241
      %v2019 = vpop.f32.mrb[0].mxu0
      %v2020 = vadd.f32 %v1787, %v2019
      %v2021 = vpop.f32.mrb[0].mxu0
      %v2022 = vadd.f32 %v1788, %v2021
      %v2023 = vpop.f32.mrb[0].mxu0
      %v2024 = vadd.f32 %v1789, %v2023
      %v2025 = vpop.f32.mrb[0].mxu0
      %v2026 = vadd.f32 %v1790, %v2025
      %2027 = vdwg.mxu0
      %v2028 = vadd.f32 %v2010, %v1807
      %v2029 = vadd.f32 %v2012, %v1808
      %v2030 = vadd.f32 %v2014, %v1809
      %v2031 = vadd.f32 %v2016, %v1810
      %v2032 = vadd.f32 %v2020, %v1811
      %v2033 = vadd.f32 %v2022, %v1812
      %v2034 = vadd.f32 %v2024, %v1813
      %v2035 = vadd.f32 %v2026, %v1814
      %v2037 = vlaneseq
      %v2038 = vshrl.u32 %v2037, 7
      %v2039 = vsub.s32 0, %v2038
      %v2040 = vrot.slane %v1238, %v2039
      %v2041 = vlaneseq
      %v2042 = vshrl.u32 %v2041, 7
      %v2043 = vsub.s32 1, %v2042
      %v2044 = vrot.slane %v1238, %v2043
      %v2047 = vadd.f32 %v2028, %v2040
      %v2048 = vadd.f32 %v2029, %v2044
      %v2049 = vadd.f32 %v2030, %v2040
      %v2050 = vadd.f32 %v2031, %v2044
      %v2051 = vadd.f32 %v2032, %v2040
      %v2052 = vadd.f32 %v2033, %v2044
      %v2053 = vadd.f32 %v2034, %v2040
      %v2054 = vadd.f32 %v2035, %v2044
      %v2055 = vadd.f32 %v2047, %v2049
      %v2056 = vrot.slane %v2055, 4
      %v2057 = vadd.f32 %v2055, %v2056
      %v2058 = vrot.slane %v2057, 2
      %v2059 = vadd.f32 %v2057, %v2058
      %v2060 = vrot.slane %v2059, 1
      %v2061 = vadd.f32 %v2059, %v2060
      %v2062 = vadd.f32 %v2048, %v2050
      %v2063 = vrot.slane %v2062, 4
      %v2064 = vadd.f32 %v2062, %v2063
      %v2065 = vrot.slane %v2064, 2
      %v2066 = vadd.f32 %v2064, %v2065
      %v2067 = vrot.slane %v2066, 1
      %v2068 = vadd.f32 %v2066, %v2067
      %v2069 = vadd.f32 %v2051, %v2053
      %v2070 = vrot.slane %v2069, 4
      %v2071 = vadd.f32 %v2069, %v2070
      %v2072 = vrot.slane %v2071, 2
      %v2073 = vadd.f32 %v2071, %v2072
      %v2074 = vrot.slane %v2073, 1
      %v2075 = vadd.f32 %v2073, %v2074
      %v2076 = vadd.f32 %v2052, %v2054
      %v2077 = vrot.slane %v2076, 4
      %v2078 = vadd.f32 %v2076, %v2077
      %v2079 = vrot.slane %v2078, 2
      %v2080 = vadd.f32 %v2078, %v2079
      %v2081 = vrot.slane %v2080, 1
      %v2082 = vadd.f32 %v2080, %v2081
      %v2083 = vpack.c.bf16 %v2061, %v2061
      %v2084 = vpack.c.bf16 %v2068, %v2068
      %v2085 = vpack.c.bf16 %v2075, %v2075
      %v2086 = vpack.c.bf16 %v2082, %v2082
      %v2087 = vld [vmem:[%s5] sm:$0xf]
      %v2088 = vld [vmem:[%s5 + $0x4] sm:$0xf]
      %v2089 = vld [vmem:[%s5 + $0x8] sm:$0xf]
      %v2090 = vld [vmem:[%s5 + $0xc] sm:$0xf]
      %v2091 = vld [vmem:[%s5 + $0x10] sm:$0xf]
      %v2092 = vld [vmem:[%s5 + $0x14] sm:$0xf]
      %v2093 = vld [vmem:[%s5 + $0x18] sm:$0xf]
      %v2094 = vld [vmem:[%s5 + $0x1c] sm:$0xf]
      %v2095 = vld [vmem:[%s5 + $0x20] sm:$0xf]
      %v2096 = vld [vmem:[%s5 + $0x24] sm:$0xf]
      %v2097 = vld [vmem:[%s5 + $0x28] sm:$0xf]
      %v2098 = vld [vmem:[%s5 + $0x2c] sm:$0xf]
      %v2099 = vld [vmem:[%s5 + $0x30] sm:$0xf]
      %v2100 = vld [vmem:[%s5 + $0x34] sm:$0xf]
      %v2101 = vld [vmem:[%s5 + $0x38] sm:$0xf]
      %v2102 = vld [vmem:[%s5 + $0x3c] sm:$0xf]
      %v2103 = vld [vmem:[%s5 + $0x40] sm:$0xf]
      %v2104 = vld [vmem:[%s5 + $0x44] sm:$0xf]
      %v2105 = vld [vmem:[%s5 + $0x48] sm:$0xf]
      %v2106 = vld [vmem:[%s5 + $0x4c] sm:$0xf]
      %v2107 = vld [vmem:[%s5 + $0x50] sm:$0xf]
      %v2108 = vld [vmem:[%s5 + $0x54] sm:$0xf]
      %v2109 = vld [vmem:[%s5 + $0x58] sm:$0xf]
      %v2110 = vld [vmem:[%s5 + $0x5c] sm:$0xf]
      %v2111 = vld [vmem:[%s5 + $0x60] sm:$0xf]
      %v2112 = vld [vmem:[%s5 + $0x64] sm:$0xf]
      %v2113 = vld [vmem:[%s5 + $0x68] sm:$0xf]
      %v2114 = vld [vmem:[%s5 + $0x6c] sm:$0xf]
      %v2115 = vld [vmem:[%s5 + $0x70] sm:$0xf]
      %v2116 = vld [vmem:[%s5 + $0x74] sm:$0xf]
      %v2117 = vld [vmem:[%s5 + $0x78] sm:$0xf]
      %v2118 = vld [vmem:[%s5 + $0x7c] sm:$0xf]
      %v2119 = vld [vmem:[%s6] sm:$0x1]
      %v2121 = vlaneseq
      %v2122 = vshrl.u32 %v2121, 7
      %v2123 = vsub.s32 0, %v2122
      %v2124 = vrot.slane %v2119, %v2123
      %v2130 = vunpack.c.l.b16 %v2083
      %v2131 = vunpack.c.l.b16 %v2084
      %v2132 = vunpack.c.l.b16 %v2085
      %v2133 = vunpack.c.l.b16 %v2086
      %vm2134 = vcmask 1041409
      %v2135 = vsel %vm2134, %v2132, %v2130
      %v2136 = vsel %vm2134, %v2133, %v2131
      %v2137 = vpack.c.b16 %v2135, %v2135
      %v2138 = vpack.c.b16 %v2136, %v2136
      %v2173 = vunpack.c.l.b16 %v2087
      %v2174 = vunpack.c.l.b16 %v2088
      %v2175 = vunpack.c.l.b16 %v2089
      %v2176 = vunpack.c.l.b16 %v2090
      %v2177 = vunpack.c.l.b16 %v2091
      %v2178 = vunpack.c.l.b16 %v2092
      %v2179 = vunpack.c.l.b16 %v2093
      %v2180 = vunpack.c.l.b16 %v2094
      %v2181 = vunpack.c.l.b16 %v2095
      %v2182 = vunpack.c.l.b16 %v2096
      %v2183 = vunpack.c.l.b16 %v2097
      %v2184 = vunpack.c.l.b16 %v2098
      %v2185 = vunpack.c.l.b16 %v2099
      %v2186 = vunpack.c.l.b16 %v2100
      %v2187 = vunpack.c.l.b16 %v2101
      %v2188 = vunpack.c.l.b16 %v2102
      %v2189 = vunpack.c.l.b16 %v2103
      %v2190 = vunpack.c.l.b16 %v2104
      %v2191 = vunpack.c.l.b16 %v2105
      %v2192 = vunpack.c.l.b16 %v2106
      %v2193 = vunpack.c.l.b16 %v2107
      %v2194 = vunpack.c.l.b16 %v2108
      %v2195 = vunpack.c.l.b16 %v2109
      %v2196 = vunpack.c.l.b16 %v2110
      %v2197 = vunpack.c.l.b16 %v2111
      %v2198 = vunpack.c.l.b16 %v2112
      %v2199 = vunpack.c.l.b16 %v2113
      %v2200 = vunpack.c.l.b16 %v2114
      %v2201 = vunpack.c.l.b16 %v2115
      %v2202 = vunpack.c.l.b16 %v2116
      %v2203 = vunpack.c.l.b16 %v2117
      %v2204 = vunpack.c.l.b16 %v2118
      %v2205 = vpack.c.b16 %v2174, %v2173
      %v2206 = vpack.c.b16 %v2176, %v2175
      %v2207 = vpack.c.b16 %v2178, %v2177
      %v2208 = vpack.c.b16 %v2180, %v2179
      %v2209 = vpack.c.b16 %v2182, %v2181
      %v2210 = vpack.c.b16 %v2184, %v2183
      %v2211 = vpack.c.b16 %v2186, %v2185
      %v2212 = vpack.c.b16 %v2188, %v2187
      %v2213 = vpack.c.b16 %v2190, %v2189
      %v2214 = vpack.c.b16 %v2192, %v2191
      %v2215 = vpack.c.b16 %v2194, %v2193
      %v2216 = vpack.c.b16 %v2196, %v2195
      %v2217 = vpack.c.b16 %v2198, %v2197
      %v2218 = vpack.c.b16 %v2200, %v2199
      %v2219 = vpack.c.b16 %v2202, %v2201
      %v2220 = vpack.c.b16 %v2204, %v2203
      %2237 = vmatprep.subr.bf16.mxu0 0
      %2238 = vmatpush1.bf16.msra.mxu0 %v2205
      %2239 = vmatprep.subr.bf16.mxu0 0
      %2240 = vmatpush1.bf16.msra.mxu0 %v2206
      %2241 = vmatprep.subr.bf16.mxu0 0
      %2242 = vmatpush1.bf16.msra.mxu0 %v2207
      %2243 = vmatprep.subr.bf16.mxu0 0
      %2244 = vmatpush1.bf16.msra.mxu0 %v2208
      %2245 = vmatprep.subr.bf16.mxu0 0
      %2246 = vmatpush1.bf16.msra.mxu0 %v2209
      %2247 = vmatprep.subr.bf16.mxu0 0
      %2248 = vmatpush1.bf16.msra.mxu0 %v2210
      %2249 = vmatprep.subr.bf16.mxu0 0
      %2250 = vmatpush1.bf16.msra.mxu0 %v2211
      %2251 = vmatprep.subr.bf16.mxu0 0
      %2252 = vmatpush1.bf16.msra.mxu0 %v2212
      %2253 = vmatprep.subr.bf16.mxu0 0
      %2254 = vmatpush1.bf16.msra.mxu0 %v2213
      %2255 = vmatprep.subr.bf16.mxu0 0
      %2256 = vmatpush1.bf16.msra.mxu0 %v2214
      %2257 = vmatprep.subr.bf16.mxu0 0
      %2258 = vmatpush1.bf16.msra.mxu0 %v2215
      %2259 = vmatprep.subr.bf16.mxu0 0
      %2260 = vmatpush1.bf16.msra.mxu0 %v2216
      %2261 = vmatprep.subr.bf16.mxu0 0
      %2262 = vmatpush1.bf16.msra.mxu0 %v2217
      %2263 = vmatprep.subr.bf16.mxu0 0
      %2264 = vmatpush1.bf16.msra.mxu0 %v2218
      %2265 = vmatprep.subr.bf16.mxu0 0
      %2266 = vmatpush1.bf16.msra.mxu0 %v2219
      %2267 = vmatprep.subr.bf16.mxu0 0
      %2268 = vmatpush1.bf16.msra.mxu0 %v2220
      %2269 = vmatprep.mubr.bf16.mxu0 %v2138
      %2270 = vmatmul.mubr.bf16.gmra.mrb[0].mxu0 %v2137
      %v2271 = vpop.f32.mrb[0].mxu0
      %v2272 = vadd.f32 %v2124, %v2271
      %v2273 = vpop.f32.mrb[0].mxu0
      %v2274 = vpop.f32.mrb[0].mxu0
      %v2275 = vpop.f32.mrb[0].mxu0
      %2276 = vdwg.mxu0
      %v2277 = vmax.f32 %v2272, 0.0
      %v2278 = vpack.c.bf16 %v2277, %v2277
      %v2279 = vld [vmem:[%s7] sm:$0xff]
      %v2280 = vld [vmem:[%s7 + $0x8] sm:$0xff]
      %v2281 = vld [vmem:[%s7 + $0x10] sm:$0xff]
      %v2282 = vld [vmem:[%s7 + $0x18] sm:$0xff]
      %v2283 = vld [vmem:[%s7 + $0x20] sm:$0xff]
      %v2284 = vld [vmem:[%s7 + $0x28] sm:$0xff]
      %v2285 = vld [vmem:[%s7 + $0x30] sm:$0xff]
      %v2286 = vld [vmem:[%s7 + $0x38] sm:$0xff]
      %v2287 = vld [vmem:[%s7 + $0x40] sm:$0xff]
      %v2288 = vld [vmem:[%s7 + $0x48] sm:$0xff]
      %v2289 = vld [vmem:[%s7 + $0x50] sm:$0xff]
      %v2290 = vld [vmem:[%s7 + $0x58] sm:$0xff]
      %v2291 = vld [vmem:[%s7 + $0x60] sm:$0xff]
      %v2292 = vld [vmem:[%s7 + $0x68] sm:$0xff]
      %v2293 = vld [vmem:[%s7 + $0x70] sm:$0xff]
      %v2294 = vld [vmem:[%s7 + $0x78] sm:$0xff]
      %v2295 = vld [vmem:[%s8] sm:$0x3]
      %v2297 = vlaneseq
      %v2298 = vshrl.u32 %v2297, 7
      %v2299 = vsub.s32 0, %v2298
      %v2300 = vrot.slane %v2295, %v2299
      %v2301 = vlaneseq
      %v2302 = vshrl.u32 %v2301, 7
      %v2303 = vsub.s32 1, %v2302
      %v2304 = vrot.slane %v2295, %v2303
      %v2323 = vunpack.c.l.b16 %v2279
      %v2324 = vunpack.c.h.b16 %v2279
      %v2325 = vunpack.c.l.b16 %v2280
      %v2326 = vunpack.c.h.b16 %v2280
      %v2327 = vunpack.c.l.b16 %v2281
      %v2328 = vunpack.c.h.b16 %v2281
      %v2329 = vunpack.c.l.b16 %v2282
      %v2330 = vunpack.c.h.b16 %v2282
      %v2331 = vunpack.c.l.b16 %v2283
      %v2332 = vunpack.c.h.b16 %v2283
      %v2333 = vunpack.c.l.b16 %v2284
      %v2334 = vunpack.c.h.b16 %v2284
      %v2335 = vunpack.c.l.b16 %v2285
      %v2336 = vunpack.c.h.b16 %v2285
      %v2337 = vunpack.c.l.b16 %v2286
      %v2338 = vunpack.c.h.b16 %v2286
      %v2339 = vunpack.c.l.b16 %v2287
      %v2340 = vunpack.c.h.b16 %v2287
      %v2341 = vunpack.c.l.b16 %v2288
      %v2342 = vunpack.c.h.b16 %v2288
      %v2343 = vunpack.c.l.b16 %v2289
      %v2344 = vunpack.c.h.b16 %v2289
      %v2345 = vunpack.c.l.b16 %v2290
      %v2346 = vunpack.c.h.b16 %v2290
      %v2347 = vunpack.c.l.b16 %v2291
      %v2348 = vunpack.c.h.b16 %v2291
      %v2349 = vunpack.c.l.b16 %v2292
      %v2350 = vunpack.c.h.b16 %v2292
      %v2351 = vunpack.c.l.b16 %v2293
      %v2352 = vunpack.c.h.b16 %v2293
      %v2353 = vunpack.c.l.b16 %v2294
      %v2354 = vunpack.c.h.b16 %v2294
      %v2355 = vpack.c.b16 %v2325, %v2323
      %v2356 = vpack.c.b16 %v2326, %v2324
      %v2357 = vpack.c.b16 %v2329, %v2327
      %v2358 = vpack.c.b16 %v2330, %v2328
      %v2359 = vpack.c.b16 %v2333, %v2331
      %v2360 = vpack.c.b16 %v2334, %v2332
      %v2361 = vpack.c.b16 %v2337, %v2335
      %v2362 = vpack.c.b16 %v2338, %v2336
      %v2363 = vpack.c.b16 %v2341, %v2339
      %v2364 = vpack.c.b16 %v2342, %v2340
      %v2365 = vpack.c.b16 %v2345, %v2343
      %v2366 = vpack.c.b16 %v2346, %v2344
      %v2367 = vpack.c.b16 %v2349, %v2347
      %v2368 = vpack.c.b16 %v2350, %v2348
      %v2369 = vpack.c.b16 %v2353, %v2351
      %v2370 = vpack.c.b16 %v2354, %v2352
      %2387 = vmatprep.subr.bf16.mxu0 %v2356
      %2388 = vmatpush1.bf16.msra.mxu0 %v2355
      %2389 = vmatprep.subr.bf16.mxu0 %v2358
      %2390 = vmatpush1.bf16.msra.mxu0 %v2357
      %2391 = vmatprep.subr.bf16.mxu0 %v2360
      %2392 = vmatpush1.bf16.msra.mxu0 %v2359
      %2393 = vmatprep.subr.bf16.mxu0 %v2362
      %2394 = vmatpush1.bf16.msra.mxu0 %v2361
      %2395 = vmatprep.subr.bf16.mxu0 %v2364
      %2396 = vmatpush1.bf16.msra.mxu0 %v2363
      %2397 = vmatprep.subr.bf16.mxu0 %v2366
      %2398 = vmatpush1.bf16.msra.mxu0 %v2365
      %2399 = vmatprep.subr.bf16.mxu0 %v2368
      %2400 = vmatpush1.bf16.msra.mxu0 %v2367
      %2401 = vmatprep.subr.bf16.mxu0 %v2370
      %2402 = vmatpush1.bf16.msra.mxu0 %v2369
      %2403 = vmatprep.subr.bf16.mxu0 0
      %2404 = vmatpush1.bf16.msra.mxu0 0
      %2405 = vmatprep.subr.bf16.mxu0 0
      %2406 = vmatpush1.bf16.msra.mxu0 0
      %2407 = vmatprep.subr.bf16.mxu0 0
      %2408 = vmatpush1.bf16.msra.mxu0 0
      %2409 = vmatprep.subr.bf16.mxu0 0
      %2410 = vmatpush1.bf16.msra.mxu0 0
      %2411 = vmatprep.subr.bf16.mxu0 0
      %2412 = vmatpush1.bf16.msra.mxu0 0
      %2413 = vmatprep.subr.bf16.mxu0 0
      %2414 = vmatpush1.bf16.msra.mxu0 0
      %2415 = vmatprep.subr.bf16.mxu0 0
      %2416 = vmatpush1.bf16.msra.mxu0 0
      %2417 = vmatprep.subr.bf16.mxu0 0
      %2418 = vmatpush1.bf16.msra.mxu0 0
      %2419 = vmatprep.mubr.bf16.mxu0 0
      %2420 = vmatmul.mubr.bf16.gmra.mrb[0].mxu0 %v2278
      %v2421 = vpop.f32.mrb[0].mxu0
      %v2422 = vadd.f32 %v2300, %v2421
      %v2423 = vpop.f32.mrb[0].mxu0
      %v2424 = vadd.f32 %v2304, %v2423
      %v2425 = vpop.f32.mrb[0].mxu0
      %v2426 = vpop.f32.mrb[0].mxu0
      %2427 = vdwg.mxu0
      %v2428 = vxor.u32 %v2422, 2147483648
      %v2429 = vxor.u32 %v2424, 2147483648
      %v2430 = vmul.f32 %v2428, 1.442695
      %v2431 = vpow.pop %v2430
      %v2432 = vmul.f32 %v2429, 1.442695
      %v2433 = vpow.pop %v2432
      %v2434 = vadd.f32 %v2431, 1.0
      %v2435 = vadd.f32 %v2433, 1.0
      %v2436 = vrcp.pop %v2434
      %v2437 = vmul.f32 1.0, %v2436
      %v2438 = vrcp.pop %v2435
      %v2439 = vmul.f32 1.0, %v2438
      %v2442 = vcombine.low %v2437, %v2439
      %v2444 = vunpack.c.l.s4 1966171168
      %v2445 = vunpack.c.0.s8 %v2444
      %v2446 = vlaneseq
      %v2447 = vshrl.u32 %v2446, 7
      %v2448 = vsub.s32 %v2445, %v2447
      %v2449 = vrot.slane %v2442, %v2448
      %v2450 = vcombine.high %v2449, %v2449
      %v2452 = vunpack.c.l.s4 1966171168
      %v2453 = vunpack.c.0.s8 %v2452
      %v2454 = vlaneseq
      %v2455 = vshrl.u32 %v2454, 7
      %v2456 = vsub.s32 %v2453, %v2455
      %v2457 = vrot.slane %v2449, %v2456
      %v2459 = vunpack.c.l.s4 1966171168
      %v2460 = vunpack.c.0.s8 %v2459
      %v2461 = vlaneseq
      %v2462 = vshrl.u32 %v2461, 7
      %v2463 = vsub.s32 %v2460, %v2462
      %v2464 = vrot.slane %v2450, %v2463
      %v2465 = vlaneseq
      %v2466 = vshrl.u32 %v2465, 7
      %v2467 = vsub.s32 0, %v2466
      %v2468 = vrot.slane %v2457, %v2467
      %v2469 = vlaneseq
      %v2470 = vshrl.u32 %v2469, 7
      %v2471 = vsub.s32 1, %v2470
      %v2472 = vrot.slane %v2457, %v2471
      %v2473 = vlaneseq
      %v2474 = vshrl.u32 %v2473, 7
      %v2475 = vsub.s32 0, %v2474
      %v2476 = vrot.slane %v2464, %v2475
      %v2477 = vlaneseq
      %v2478 = vshrl.u32 %v2477, 7
      %v2479 = vsub.s32 1, %v2478
      %v2480 = vrot.slane %v2464, %v2479
      %v2485 = vmul.f32 %v2047, %v2468
      %v2486 = vmul.f32 %v2048, %v2472
      %v2487 = vmul.f32 %v2049, %v2468
      %v2488 = vmul.f32 %v2050, %v2472
      %v2489 = vmul.f32 %v2051, %v2476
      %v2490 = vmul.f32 %v2052, %v2480
      %v2491 = vmul.f32 %v2053, %v2476
      %v2492 = vmul.f32 %v2054, %v2480
      %v2493 = vadd.f32 %v2485, %v342
      %v2494 = vadd.f32 %v2486, %v343
      %v2495 = vadd.f32 %v2487, %v344
      %v2496 = vadd.f32 %v2488, %v345
      %v2497 = vadd.f32 %v2489, %v346
      %v2498 = vadd.f32 %v2490, %v347
      %v2499 = vadd.f32 %v2491, %v348
      %v2500 = vadd.f32 %v2492, %v349
      %2501 = vst [vmem:[%s339] sm:$0xff] %v2493
      %2502 = vst [vmem:[%s339 + $0x8] sm:$0xff] %v2494
      %2503 = vst [vmem:[%s339 + $0x10] sm:$0xff] %v2495
      %2504 = vst [vmem:[%s339 + $0x18] sm:$0xff] %v2496
      %2505 = vst [vmem:[%s339 + $0x20] sm:$0xff] %v2497
      %2506 = vst [vmem:[%s339 + $0x28] sm:$0xff] %v2498
      %2507 = vst [vmem:[%s339 + $0x30] sm:$0xff] %v2499
      %2508 = vst [vmem:[%s339 + $0x38] sm:$0xff] %v2500
      %s2509 = smul.u32 2, %s20
      %p2510 = scmp.lt.s32.totalorder %s2509, 3
      %s2511 = scalar_select %p2510, %s2509, 3
      %s2512 = smul.addr %s2511, 4
      %s2513 = smul.addr %s2512, 8
      %s2514 = scalar_lea.vmem %s9, %s2513
      // Predicated region
      $region57: #{rcab_forward.1} parent=55 // pred_check
        %p2515 = pneg %p232
      $region58: #{rcab_forward.1} parent=55 // pred_check_branch
        %2517 = sbr.rel (%p2515) target = $region60
      $region59: #{rcab_forward.1} parent=55 // pred_region
        %s2518 = smul.u32 2, %s20
      $region60: #{rcab_forward.1} parent=55 // pred_fallthru
        _
    $region56: #{rcab_forward.1} parent=5 // pred_fallthru
      _
    %p2519 = scmp.le.s32.totalorder 2, %s15
    // Predicated region
    $region61: #{rcab_forward.1} parent=5 // pred_check
      %p2520 = pneg %p2519
    $region62: #{rcab_forward.1} parent=5 // pred_check_branch
      %2522 = sbr.rel (%p2520) target = $region64
    $region63: #{rcab_forward.1} parent=5 // pred_region
      %s2523 = ssub.s32 %s15, 2
      // Predicated region
      $region65: #{rcab_forward.1} parent=63 // pred_check
        %p2524 = pneg %p238
      $region66: #{rcab_forward.1} parent=63 // pred_check_branch
        %2526 = sbr.rel (%p2524) target = $region68
      $region67: #{rcab_forward.1} parent=63 // pred_region
        %s2527 = smul.u32 2, %s21
        %p2528 = scmp.lt.s32.totalorder %s2527, 3
        %s2529 = scalar_select %p2528, %s2527, 3
        %s2530 = smul.addr %s2529, 4
        %s2531 = smul.addr %s2530, 8
        %s2532 = scalar_lea.vmem %s9, %s2531
      $region68: #{rcab_forward.1} parent=63 // pred_fallthru
        _
    $region64: #{rcab_forward.1} parent=5 // pred_fallthru
      _
  $region6: #{rcab_forward.1} parent=0 // loop_footer
    %s19 = sadd.s32 1, %s15
  $region7: #{rcab_forward.1} parent=0 // loop_footer_branch
    %14 = sbr.rel target = $region3
  $region8: #{rcab_forward.1} parent=0 // loop_exit
    _

</llo_original>
